<compile_context>
chip_gen: v6e
topology: v6e:2x2x1
jax: 0.10.0
libtpu: 0.0.40
codegen_flags: <defaults>
</compile_context>

<pallas_src>
import math
import functools

import jax
import jax.numpy as jnp
from jax.experimental import pallas as pl
from jax.experimental.pallas import tpu as pltpu

LEAKYRELU_SLOPE = math.sqrt(5.0)
BN_EPS = 1e-5
LANE = 128


# ------------------------------ math helpers --------------------------------

def _bn(z):
    # BatchNorm1d, training mode, no (or identity) affine: stats over axis 0.
    mu = jnp.mean(z, axis=0, keepdims=True)
    var = jnp.mean((z - mu) ** 2, axis=0, keepdims=True)   # biased variance
    return (z - mu) * jax.lax.rsqrt(var + BN_EPS)


def _lrelu(z):
    return jnp.where(z >= 0, z, LEAKYRELU_SLOPE * z)


def _mm(x, w):
    return jnp.dot(x, w, preferred_element_type=jnp.float32)


def _ceil_lane(n):
    return ((n + LANE - 1) // LANE) * LANE


def _pick_vmem_limit():
    try:
        info = pltpu.get_tpu_info()
        cap = int(getattr(info, "vmem_capacity_bytes", 64 * 1024 * 1024))
    except Exception:
        cap = 64 * 1024 * 1024
    # ~96 MiB scoped on 128-MiB chips (v5e/v6e), ~48 MiB on v7x (64 MiB phys).
    return min(100 * 1024 * 1024, (cap * 3) // 4)


# ------------------------------ Pallas kernel -------------------------------

def _ddcca_kernel(*refs, n_mlp_layers):
    """refs = (x1, mlp_w1,mlp_b1,...,mlp_wN,mlp_bN,
               emb, x2, hw1, hw2, hw3, fat_b, tw2, tb2, w_out, b_out, out)

    Grid step 0 -> MLP view (writes out slab 0)
    Grid step 1 -> DN  view (writes out slab 1)
    All weights already transposed+padded to [in_pad, out_pad]; biases [1, out_pad].
    """
    out_ref = refs[-1]
    x1_ref = refs[0]
    mlp_refs = refs[1:1 + 2 * n_mlp_layers]
    (emb_ref, x2_ref, hw1_ref, hw2_ref, hw3_ref,
     fat_b_ref, tw2_ref, tb2_ref, two_ref, tbo_ref) = refs[1 + 2 * n_mlp_layers:-1]

    view = pl.program_id(0)

    @pl.when(view == 0)
    def _mlp_view():
        h = x1_ref[...].astype(jnp.float32)
        for i in range(n_mlp_layers):
            w = mlp_refs[2 * i][...].astype(jnp.float32)
            b = mlp_refs[2 * i + 1][...].astype(jnp.float32)
            if i == n_mlp_layers - 1:
                h = _bn(h)                          # last layer: BN -> Linear
                h = _mm(h, w) + b
            else:
                h = jax.nn.sigmoid(_mm(h, w) + b)   # hidden: Linear -> Sigmoid -> BN
                h = _bn(h)
        out_ref[...] = h.astype(out_ref.dtype)

    @pl.when(view == 1)
    def _dn_view():
        f32 = jnp.float32
        # Hyper_net: (Linear no-bias -> BN -> LeakyReLU) x2, then Linear
        e = emb_ref[...].astype(f32)
        a1 = _lrelu(_bn(_mm(e, hw1_ref[...].astype(f32))))
        a2 = _lrelu(_bn(_mm(a1, hw2_ref[...].astype(f32))))
        feat = _mm(a2, hw3_ref[...].astype(f32))            # [input_size2, H_pad]
        # Target_net: fatLayer_weights = feat.T ; F.linear(x, W, b) = x @ feat + b
        x = _bn(x2_ref[...].astype(f32))                    # bn0 (identity affine at init)
        z1 = _mm(x, feat) + fat_b_ref[...].astype(f32)
        a1t = _lrelu(_bn(z1))
        z2 = _mm(a1t, tw2_ref[...].astype(f32)) + tb2_ref[...].astype(f32)
        a2t = _lrelu(_bn(z2))
        out = _mm(a2t, two_ref[...].astype(f32)) + tbo_ref[...].astype(f32)
        out_ref[...] = out.astype(out_ref.dtype)            # incl_softmax=False


# ------------------------------ param preparation ---------------------------
# Runs ONCE at setup (NOT inside the jitted forward): transpose + zero-pad.

def _zero_pad_2d(a, rows, cols):
    a = jnp.asarray(a, jnp.float32)
    return jnp.pad(a, ((0, rows - a.shape[0]), (0, cols - a.shape[1])))


def prepare_ddcca_params(mlp_params, hyper_params, target_params):
    """mlp_params: list of (w [out,in], b [out]).
    hyper_params: {"w1","w2","w3"} PyTorch [out,in].
    target_params: {"fat_bias","w2","b2","w_out","b_out"}."""
    out1_f = mlp_params[-1][0].shape[0]
    out2_f = target_params["w_out"].shape[0]
    out_pad = max(_ceil_lane(out1_f), _ceil_lane(out2_f))

    # --- MlpNet: weight rows padded to the previous layer's padded width -----
    mlp_padded = []
    prev_out_pad = None
    n = len(mlp_params)
    for i, (w, b) in enumerate(mlp_params):
        w_t = jnp.asarray(w, jnp.float32).T                   # [in, out]
        in_rows = w_t.shape[0] if prev_out_pad is None else prev_out_pad
        out_cols = out_pad if i == n - 1 else _ceil_lane(w_t.shape[1])
        mlp_padded.append((_zero_pad_2d(w_t, in_rows, out_cols),
                           _zero_pad_2d(jnp.asarray(b, jnp.float32).reshape(1, -1),
                                        1, out_cols)))
        prev_out_pad = out_cols

    # --- DNModel --------------------------------------------------------------
    hw1 = jnp.asarray(hyper_params["w1"], jnp.float32).T      # [n_feats_emb, H]
    hw2 = jnp.asarray(hyper_params["w2"], jnp.float32).T
    hw3 = jnp.asarray(hyper_params["w3"], jnp.float32).T
    h_pad = _ceil_lane(hw1.shape[1])
    tw2 = jnp.asarray(target_params["w2"], jnp.float32).T     # [H, H2]
    h2_pad = _ceil_lane(tw2.shape[1])
    two = jnp.asarray(target_params["w_out"], jnp.float32).T  # [H2, n_targets]

    dn_padded = (
        _zero_pad_2d(hw1, hw1.shape[0], h_pad),               # emb feat dim NOT padded
        _zero_pad_2d(hw2, h_pad, h_pad),
        _zero_pad_2d(hw3, h_pad, h_pad),
        _zero_pad_2d(jnp.asarray(target_params["fat_bias"], jnp.float32).reshape(1, -1),
                     1, h_pad),
        _zero_pad_2d(tw2, h_pad, h2_pad),
        _zero_pad_2d(jnp.asarray(target_params["b2"], jnp.float32).reshape(1, -1),
                     1, h2_pad),
        _zero_pad_2d(two, h2_pad, out_pad),
        _zero_pad_2d(jnp.asarray(target_params["b_out"], jnp.float32).reshape(1, -1),
                     1, out_pad),
    )

    prepared = {"mlp": mlp_padded, "dn": dn_padded}
    meta = dict(n_mlp_layers=n, out1_features=out1_f,
                out2_features=out2_f, out_pad=out_pad)
    return prepared, meta


# ------------------------------ forward wrapper ------------------------------

def ddcca_forward(x1, x2, emb, prepared, *, n_mlp_layers, out1_features,
                  out2_features, out_pad):
    x1 = jnp.asarray(x1, jnp.float32)
    x2 = jnp.asarray(x2, jnp.float32)
    emb = jnp.asarray(emb, jnp.float32)
    B = x1.shape[0]

    flat = [x1]
    for w, b in prepared["mlp"]:
        flat += [w, b]
    flat += [emb, x2] + list(prepared["dn"])

    # Advisory cost estimate (all Python ints from static shapes).
    S, F = emb.shape
    h_pad = prepared["dn"][0].shape[1]
    h2_pad = prepared["dn"][4].shape[1]
    flops = 0
    for w, _ in prepared["mlp"]:
        flops += 2 * B * w.shape[0] * w.shape[1]
    flops += 2 * S * F * h_pad + 2 * 2 * S * h_pad * h_pad           # hyper-net
    flops += 2 * B * S * h_pad + 2 * B * h_pad * h2_pad + 2 * B * h2_pad * out_pad
    trans = B * sum(w.shape[1] for w, _ in prepared["mlp"][:-1])     # sigmoid exps
    bytes_accessed = sum(int(a.size) * 4 for a in flat) + 2 * B * out_pad * 4
    ce = pl.CostEstimate(flops=int(flops), transcendentals=int(trans),
                         bytes_accessed=int(bytes_accessed))

    in_specs = [pl.BlockSpec(a.shape, lambda i: (0, 0)) for a in flat]
    out_spec = pl.BlockSpec((None, B, out_pad), lambda i: (i, 0, 0))

    kernel = functools.partial(_ddcca_kernel, n_mlp_layers=n_mlp_layers)
    combined = pl.pallas_call(
        kernel,
        out_shape=jax.ShapeDtypeStruct((2, B, out_pad), jnp.float32),
        grid_spec=pltpu.PrefetchScalarGridSpec(
            num_scalar_prefetch=0,
            grid=(2,),                      # step 0: MLP view, step 1: DN view
            in_specs=in_specs,
            out_specs=out_spec),
        compiler_params=pltpu.CompilerParams(
            dimension_semantics=("parallel",),      # v7x: one view per TensorCore
            vmem_limit_bytes=_pick_vmem_limit()),
        cost_estimate=ce,
    )(*flat)

    return combined[0, :, :out1_features], combined[1, :, :out2_features]


# ------------------------------ pure-JAX reference ---------------------------

def _ref_mm(a, b):
    return jnp.dot(a, b, precision=jax.lax.Precision.HIGHEST)


def _ref_mlp(x, params):
    h = jnp.asarray(x, jnp.float32)
    n = len(params)
    for i, (w, b) in enumerate(params):
        if i == n - 1:
            h = _bn(h)
            h = _ref_mm(h, w.T) + b
        else:
            h = jax.nn.sigmoid(_ref_mm(h, w.T) + b)
            h = _bn(h)
    return h


def _ref_dn(emb, x2, hp, tp):
    a1 = _lrelu(_bn(_ref_mm(emb, hp["w1"].T)))
    a2 = _lrelu(_bn(_ref_mm(a1, hp["w2"].T)))
    feat = _ref_mm(a2, hp["w3"].T)
    x = _bn(jnp.asarray(x2, jnp.float32))
    z1 = _ref_mm(x, feat) + tp["fat_bias"]
    a1t = _lrelu(_bn(z1))
    z2 = _ref_mm(a1t, tp["w2"].T) + tp["b2"]
    a2t = _lrelu(_bn(z2))
    return _ref_mm(a2t, tp["w_out"].T) + tp["b_out"]


# ------------------------------ param init ----------------------------------

def linear_init(key, in_f, out_f, bias=True, zero_bias=False):
    # PyTorch default: kaiming_uniform(a=sqrt(5)) ~ U(-1/sqrt(in), 1/sqrt(in))
    kw, kb = jax.random.split(key)
    bound = 1.0 / math.sqrt(in_f)
    w = jax.random.uniform(kw, (out_f, in_f), jnp.float32, -bound, bound)
    if not bias:
        return w, None
    if zero_bias:
        return w, jnp.zeros((out_f,), jnp.float32)
    b = jax.random.uniform(kb, (out_f,), jnp.float32, -bound, bound)
    return w, b


# --------------------------------- main --------------------------------------

if __name__ == "__main__":
    key = jax.random.PRNGKey(0)
    keys = jax.random.split(key, 16)

    # Small shapes consistent with the module.
    # NOTE: batch=8 keeps MXU rows mostly idle; real training should stack
    # micro-batches so M >= 64 (see perf review) — kept small here per test spec.
    batch = 8
    input_size1 = 16
    layer_sizes1 = [32, 32, 10]            # MlpNet layer sizes (outdim = 10)
    input_size2 = 16                       # n feats of x2 == rows of emb
    n_feats_emb2 = 8
    n_hidden_u = 32                        # emb_n_hidden_u == discrim_n_hidden1_u
    n_hidden2_u = 32
    n_targets = 10

    # inputs
    x1 = jax.random.normal(keys[0], (batch, input_size1), jnp.float32)
    x2 = jax.random.normal(keys[1], (batch, input_size2), jnp.float32)
    emb = jax.random.normal(keys[2], (input_size2, n_feats_emb2), jnp.float32)

    # MlpNet params
    mlp_params = []
    sizes = [input_size1] + layer_sizes1
    for i in range(len(sizes) - 1):
        mlp_params.append(linear_init(keys[3 + i], sizes[i], sizes[i + 1]))

    # Hyper_net params (Linear bias=False)
    hw1, _ = linear_init(keys[7], n_feats_emb2, n_hidden_u, bias=False)
    hw2, _ = linear_init(keys[8], n_hidden_u, n_hidden_u, bias=False)
    hw3, _ = linear_init(keys[9], n_hidden_u, n_hidden_u, bias=False)
    hyper_params = {"w1": hw1, "w2": hw2, "w3": hw3}

    # Target_net params (biases explicitly zeroed in the module)
    tw2, _ = linear_init(keys[10], n_hidden_u, n_hidden2_u)
    two, _ = linear_init(keys[11], n_hidden2_u, n_targets)
    target_params = {
        "fat_bias": jnp.zeros((n_hidden_u,), jnp.float32),
        "w2": tw2, "b2": jnp.zeros((n_hidden2_u,), jnp.float32),
        "w_out": two, "b_out": jnp.zeros((n_targets,), jnp.float32),
    }

    # One-time parameter preparation (padding/transposition hoisted out of the
    # per-step path), then a jitted forward over already-padded params.
    prepared, meta = prepare_ddcca_params(mlp_params, hyper_params, target_params)
    fwd = jax.jit(functools.partial(ddcca_forward, **meta))

    out1, out2 = fwd(x1, x2, emb, prepared)
    jax.block_until_ready((out1, out2))

    assert out1.shape == (batch, layer_sizes1[-1])
    assert out2.shape == (batch, n_targets)
    assert bool(jnp.all(jnp.isfinite(out1))) and bool(jnp.all(jnp.isfinite(out2)))

    # Cross-check against a pure-JAX reference of the same forward.
    ref1 = _ref_mlp(x1, mlp_params)
    ref2 = _ref_dn(emb, x2, hyper_params, target_params)
    assert bool(jnp.allclose(out1, ref1, rtol=2e-2, atol=2e-2))
    assert bool(jnp.allclose(out2, ref2, rtol=2e-2, atol=2e-2))

    print("KERNEL_OK")
</pallas_src>

<mosaic_0001>
module attributes {stable_mosaic.version = 11 : i64} {
  func.func @_ddcca_kernel(%arg0: i32, %arg1: memref<8x16xf32, #tpu.memory_space<vmem>>, %arg2: memref<16x128xf32, #tpu.memory_space<vmem>>, %arg3: memref<1x128xf32, #tpu.memory_space<vmem>>, %arg4: memref<128x128xf32, #tpu.memory_space<vmem>>, %arg5: memref<1x128xf32, #tpu.memory_space<vmem>>, %arg6: memref<128x128xf32, #tpu.memory_space<vmem>>, %arg7: memref<1x128xf32, #tpu.memory_space<vmem>>, %arg8: memref<16x8xf32, #tpu.memory_space<vmem>>, %arg9: memref<8x16xf32, #tpu.memory_space<vmem>>, %arg10: memref<8x128xf32, #tpu.memory_space<vmem>>, %arg11: memref<128x128xf32, #tpu.memory_space<vmem>>, %arg12: memref<128x128xf32, #tpu.memory_space<vmem>>, %arg13: memref<1x128xf32, #tpu.memory_space<vmem>>, %arg14: memref<128x128xf32, #tpu.memory_space<vmem>>, %arg15: memref<1x128xf32, #tpu.memory_space<vmem>>, %arg16: memref<128x128xf32, #tpu.memory_space<vmem>>, %arg17: memref<1x128xf32, #tpu.memory_space<vmem>>, %arg18: memref<1x8x128xf32, #tpu.memory_space<vmem>>) attributes {dimension_semantics = [#tpu.dimension_semantics<parallel>], iteration_bounds = array<i64: 2>, scalar_prefetch = 0 : i64, scratch_operands = 0 : i64, tpu.core_type = #tpu.core_type<tc>, window_params = [{pipeline_mode = #tpu.pipeline_mode<synchronous>, transform_indices = @transform_0, window_bounds = array<i64: 8, 16>}, {pipeline_mode = #tpu.pipeline_mode<synchronous>, transform_indices = @transform_1, window_bounds = array<i64: 16, 128>}, {pipeline_mode = #tpu.pipeline_mode<synchronous>, transform_indices = @transform_2, window_bounds = array<i64: 1, 128>}, {pipeline_mode = #tpu.pipeline_mode<synchronous>, transform_indices = @transform_3, window_bounds = array<i64: 128, 128>}, {pipeline_mode = #tpu.pipeline_mode<synchronous>, transform_indices = @transform_4, window_bounds = array<i64: 1, 128>}, {pipeline_mode = #tpu.pipeline_mode<synchronous>, transform_indices = @transform_5, window_bounds = array<i64: 128, 128>}, {pipeline_mode = #tpu.pipeline_mode<synchronous>, transform_indices = @transform_6, window_bounds = array<i64: 1, 128>}, {pipeline_mode = #tpu.pipeline_mode<synchronous>, transform_indices = @transform_7, window_bounds = array<i64: 16, 8>}, {pipeline_mode = #tpu.pipeline_mode<synchronous>, transform_indices = @transform_8, window_bounds = array<i64: 8, 16>}, {pipeline_mode = #tpu.pipeline_mode<synchronous>, transform_indices = @transform_9, window_bounds = array<i64: 8, 128>}, {pipeline_mode = #tpu.pipeline_mode<synchronous>, transform_indices = @transform_10, window_bounds = array<i64: 128, 128>}, {pipeline_mode = #tpu.pipeline_mode<synchronous>, transform_indices = @transform_11, window_bounds = array<i64: 128, 128>}, {pipeline_mode = #tpu.pipeline_mode<synchronous>, transform_indices = @transform_12, window_bounds = array<i64: 1, 128>}, {pipeline_mode = #tpu.pipeline_mode<synchronous>, transform_indices = @transform_13, window_bounds = array<i64: 128, 128>}, {pipeline_mode = #tpu.pipeline_mode<synchronous>, transform_indices = @transform_14, window_bounds = array<i64: 1, 128>}, {pipeline_mode = #tpu.pipeline_mode<synchronous>, transform_indices = @transform_15, window_bounds = array<i64: 128, 128>}, {pipeline_mode = #tpu.pipeline_mode<synchronous>, transform_indices = @transform_16, window_bounds = array<i64: 1, 128>}, {transform_indices = @transform_17, window_bounds = array<i64: 1, 8, 128>}]} {
    %c0_i32 = arith.constant 0 : i32
    %0 = arith.cmpi eq, %arg0, %c0_i32 : i32
    %1 = arith.extui %0 : i1 to i32
    %c0_i32_0 = arith.constant 0 : i32
    %2 = arith.cmpi ne, %1, %c0_i32_0 : i32
    scf.if %2 {
      %c0 = arith.constant 0 : index
      %c0_2 = arith.constant 0 : index
      %6 = vector.load %arg1[%c0, %c0_2] : memref<8x16xf32, #tpu.memory_space<vmem>>, vector<8x16xf32>
      %c0_3 = arith.constant 0 : index
      %c0_4 = arith.constant 0 : index
      %7 = vector.load %arg2[%c0_3, %c0_4] : memref<16x128xf32, #tpu.memory_space<vmem>>, vector<16x128xf32>
      %c0_5 = arith.constant 0 : index
      %c0_6 = arith.constant 0 : index
      %8 = vector.load %arg3[%c0_5, %c0_6] : memref<1x128xf32, #tpu.memory_space<vmem>>, vector<1x128xf32>
      %cst = arith.constant dense<0.000000e+00> : vector<8x128xf32>
      %9 = tpu.matmul %6, %7, %cst {dimension_numbers = #tpu.dot_dimension_numbers<[1], [0], [0], [1], [0, 0, 1, 1], [], []>} : vector<8x16xf32>, vector<16x128xf32>, vector<8x128xf32> -> vector<8x128xf32>
      %10 = vector.broadcast %8 : vector<1x128xf32> to vector<8x128xf32>
      %11 = arith.addf %9, %10 : vector<8x128xf32>
      %12 = arith.negf %11 : vector<8x128xf32>
      %13 = math.exp %12 : vector<8x128xf32>
      %cst_7 = arith.constant 1.000000e+00 : f32
      %14 = vector.broadcast %cst_7 : f32 to vector<8x128xf32>
      %15 = arith.addf %14, %13 : vector<8x128xf32>
      %16 = arith.divf %14, %15 : vector<8x128xf32>
      %cst_8 = arith.constant dense<0.000000e+00> : vector<128xf32>
      %17 = vector.multi_reduction <add>, %16, %cst_8 [0] : vector<8x128xf32> to vector<128xf32>
      %18 = vector.shape_cast %17 : vector<128xf32> to vector<1x128xf32>
      %cst_9 = arith.constant 8.000000e+00 : f32
      %19 = vector.broadcast %cst_9 : f32 to vector<1x128xf32>
      %20 = arith.divf %18, %19 : vector<1x128xf32>
      %21 = vector.broadcast %20 : vector<1x128xf32> to vector<8x128xf32>
      %22 = arith.subf %16, %21 : vector<8x128xf32>
      %23 = arith.mulf %22, %22 : vector<8x128xf32>
      %cst_10 = arith.constant dense<0.000000e+00> : vector<128xf32>
      %24 = vector.multi_reduction <add>, %23, %cst_10 [0] : vector<8x128xf32> to vector<128xf32>
      %25 = vector.shape_cast %24 : vector<128xf32> to vector<1x128xf32>
      %cst_11 = arith.constant 8.000000e+00 : f32
      %26 = vector.broadcast %cst_11 : f32 to vector<1x128xf32>
      %27 = arith.divf %25, %26 : vector<1x128xf32>
      %28 = vector.broadcast %20 : vector<1x128xf32> to vector<8x128xf32>
      %29 = arith.subf %16, %28 : vector<8x128xf32>
      %cst_12 = arith.constant 9.99999974E-6 : f32
      %30 = vector.broadcast %cst_12 : f32 to vector<1x128xf32>
      %31 = arith.addf %27, %30 : vector<1x128xf32>
      %32 = math.rsqrt %31 : vector<1x128xf32>
      %33 = vector.broadcast %32 : vector<1x128xf32> to vector<8x128xf32>
      %34 = arith.mulf %29, %33 : vector<8x128xf32>
      %c0_13 = arith.constant 0 : index
      %c0_14 = arith.constant 0 : index
      %35 = vector.load %arg4[%c0_13, %c0_14] : memref<128x128xf32, #tpu.memory_space<vmem>>, vector<128x128xf32>
      %c0_15 = arith.constant 0 : index
      %c0_16 = arith.constant 0 : index
      %36 = vector.load %arg5[%c0_15, %c0_16] : memref<1x128xf32, #tpu.memory_space<vmem>>, vector<1x128xf32>
      %cst_17 = arith.constant dense<0.000000e+00> : vector<8x128xf32>
      %37 = tpu.matmul %34, %35, %cst_17 {dimension_numbers = #tpu.dot_dimension_numbers<[1], [0], [0], [1], [0, 0, 1, 1], [], []>} : vector<8x128xf32>, vector<128x128xf32>, vector<8x128xf32> -> vector<8x128xf32>
      %38 = vector.broadcast %36 : vector<1x128xf32> to vector<8x128xf32>
      %39 = arith.addf %37, %38 : vector<8x128xf32>
      %40 = arith.negf %39 : vector<8x128xf32>
      %41 = math.exp %40 : vector<8x128xf32>
      %cst_18 = arith.constant 1.000000e+00 : f32
      %42 = vector.broadcast %cst_18 : f32 to vector<8x128xf32>
      %43 = arith.addf %42, %41 : vector<8x128xf32>
      %44 = arith.divf %42, %43 : vector<8x128xf32>
      %cst_19 = arith.constant dense<0.000000e+00> : vector<128xf32>
      %45 = vector.multi_reduction <add>, %44, %cst_19 [0] : vector<8x128xf32> to vector<128xf32>
      %46 = vector.shape_cast %45 : vector<128xf32> to vector<1x128xf32>
      %cst_20 = arith.constant 8.000000e+00 : f32
      %47 = vector.broadcast %cst_20 : f32 to vector<1x128xf32>
      %48 = arith.divf %46, %47 : vector<1x128xf32>
      %49 = vector.broadcast %48 : vector<1x128xf32> to vector<8x128xf32>
      %50 = arith.subf %44, %49 : vector<8x128xf32>
      %51 = arith.mulf %50, %50 : vector<8x128xf32>
      %cst_21 = arith.constant dense<0.000000e+00> : vector<128xf32>
      %52 = vector.multi_reduction <add>, %51, %cst_21 [0] : vector<8x128xf32> to vector<128xf32>
      %53 = vector.shape_cast %52 : vector<128xf32> to vector<1x128xf32>
      %cst_22 = arith.constant 8.000000e+00 : f32
      %54 = vector.broadcast %cst_22 : f32 to vector<1x128xf32>
      %55 = arith.divf %53, %54 : vector<1x128xf32>
      %56 = vector.broadcast %48 : vector<1x128xf32> to vector<8x128xf32>
      %57 = arith.subf %44, %56 : vector<8x128xf32>
      %cst_23 = arith.constant 9.99999974E-6 : f32
      %58 = vector.broadcast %cst_23 : f32 to vector<1x128xf32>
      %59 = arith.addf %55, %58 : vector<1x128xf32>
      %60 = math.rsqrt %59 : vector<1x128xf32>
      %61 = vector.broadcast %60 : vector<1x128xf32> to vector<8x128xf32>
      %62 = arith.mulf %57, %61 : vector<8x128xf32>
      %c0_24 = arith.constant 0 : index
      %c0_25 = arith.constant 0 : index
      %63 = vector.load %arg6[%c0_24, %c0_25] : memref<128x128xf32, #tpu.memory_space<vmem>>, vector<128x128xf32>
      %c0_26 = arith.constant 0 : index
      %c0_27 = arith.constant 0 : index
      %64 = vector.load %arg7[%c0_26, %c0_27] : memref<1x128xf32, #tpu.memory_space<vmem>>, vector<1x128xf32>
      %cst_28 = arith.constant dense<0.000000e+00> : vector<128xf32>
      %65 = vector.multi_reduction <add>, %62, %cst_28 [0] : vector<8x128xf32> to vector<128xf32>
      %66 = vector.shape_cast %65 : vector<128xf32> to vector<1x128xf32>
      %cst_29 = arith.constant 8.000000e+00 : f32
      %67 = vector.broadcast %cst_29 : f32 to vector<1x128xf32>
      %68 = arith.divf %66, %67 : vector<1x128xf32>
      %69 = vector.broadcast %68 : vector<1x128xf32> to vector<8x128xf32>
      %70 = arith.subf %62, %69 : vector<8x128xf32>
      %71 = arith.mulf %70, %70 : vector<8x128xf32>
      %cst_30 = arith.constant dense<0.000000e+00> : vector<128xf32>
      %72 = vector.multi_reduction <add>, %71, %cst_30 [0] : vector<8x128xf32> to vector<128xf32>
      %73 = vector.shape_cast %72 : vector<128xf32> to vector<1x128xf32>
      %cst_31 = arith.constant 8.000000e+00 : f32
      %74 = vector.broadcast %cst_31 : f32 to vector<1x128xf32>
      %75 = arith.divf %73, %74 : vector<1x128xf32>
      %76 = vector.broadcast %68 : vector<1x128xf32> to vector<8x128xf32>
      %77 = arith.subf %62, %76 : vector<8x128xf32>
      %cst_32 = arith.constant 9.99999974E-6 : f32
      %78 = vector.broadcast %cst_32 : f32 to vector<1x128xf32>
      %79 = arith.addf %75, %78 : vector<1x128xf32>
      %80 = math.rsqrt %79 : vector<1x128xf32>
      %81 = vector.broadcast %80 : vector<1x128xf32> to vector<8x128xf32>
      %82 = arith.mulf %77, %81 : vector<8x128xf32>
      %cst_33 = arith.constant dense<0.000000e+00> : vector<8x128xf32>
      %83 = tpu.matmul %82, %63, %cst_33 {dimension_numbers = #tpu.dot_dimension_numbers<[1], [0], [0], [1], [0, 0, 1, 1], [], []>} : vector<8x128xf32>, vector<128x128xf32>, vector<8x128xf32> -> vector<8x128xf32>
      %84 = vector.broadcast %64 : vector<1x128xf32> to vector<8x128xf32>
      %85 = arith.addf %83, %84 : vector<8x128xf32>
      %c0_34 = arith.constant 0 : index
      %c0_35 = arith.constant 0 : index
      %c0_36 = arith.constant 0 : index
      %86 = vector.load %arg18[%c0_34, %c0_35, %c0_36] : memref<1x8x128xf32, #tpu.memory_space<vmem>>, vector<1x8x128xf32>
      %87 = vector.shape_cast %86 : vector<1x8x128xf32> to vector<8x128xf32>
      %88 = vector.shape_cast %85 : vector<8x128xf32> to vector<1x8x128xf32>
      tpu.vector_store %arg18[%c0_34, %c0_35, %c0_36], %88 {strides = array<i32>} : memref<1x8x128xf32, #tpu.memory_space<vmem>>, vector<1x8x128xf32>,
    } else {
    }
    %c1_i32 = arith.constant 1 : i32
    %3 = arith.cmpi eq, %arg0, %c1_i32 : i32
    %4 = arith.extui %3 : i1 to i32
    %c0_i32_1 = arith.constant 0 : i32
    %5 = arith.cmpi ne, %4, %c0_i32_1 : i32
    scf.if %5 {
      %c0 = arith.constant 0 : index
      %c0_2 = arith.constant 0 : index
      %6 = vector.load %arg8[%c0, %c0_2] : memref<16x8xf32, #tpu.memory_space<vmem>>, vector<16x8xf32>
      %c0_3 = arith.constant 0 : index
      %c0_4 = arith.constant 0 : index
      %7 = vector.load %arg10[%c0_3, %c0_4] : memref<8x128xf32, #tpu.memory_space<vmem>>, vector<8x128xf32>
      %cst = arith.constant dense<0.000000e+00> : vector<16x128xf32>
      %8 = tpu.matmul %6, %7, %cst {dimension_numbers = #tpu.dot_dimension_numbers<[1], [0], [0], [1], [0, 0, 1, 1], [], []>} : vector<16x8xf32>, vector<8x128xf32>, vector<16x128xf32> -> vector<16x128xf32>
      %cst_5 = arith.constant dense<0.000000e+00> : vector<128xf32>
      %9 = vector.multi_reduction <add>, %8, %cst_5 [0] : vector<16x128xf32> to vector<128xf32>
      %10 = vector.shape_cast %9 : vector<128xf32> to vector<1x128xf32>
      %cst_6 = arith.constant 1.600000e+01 : f32
      %11 = vector.broadcast %cst_6 : f32 to vector<1x128xf32>
      %12 = arith.divf %10, %11 : vector<1x128xf32>
      %13 = vector.broadcast %12 : vector<1x128xf32> to vector<16x128xf32>
      %14 = arith.subf %8, %13 : vector<16x128xf32>
      %15 = arith.mulf %14, %14 : vector<16x128xf32>
      %cst_7 = arith.constant dense<0.000000e+00> : vector<128xf32>
      %16 = vector.multi_reduction <add>, %15, %cst_7 [0] : vector<16x128xf32> to vector<128xf32>
      %17 = vector.shape_cast %16 : vector<128xf32> to vector<1x128xf32>
      %cst_8 = arith.constant 1.600000e+01 : f32
      %18 = vector.broadcast %cst_8 : f32 to vector<1x128xf32>
      %19 = arith.divf %17, %18 : vector<1x128xf32>
      %20 = vector.broadcast %12 : vector<1x128xf32> to vector<16x128xf32>
      %21 = arith.subf %8, %20 : vector<16x128xf32>
      %cst_9 = arith.constant 9.99999974E-6 : f32
      %22 = vector.broadcast %cst_9 : f32 to vector<1x128xf32>
      %23 = arith.addf %19, %22 : vector<1x128xf32>
      %24 = math.rsqrt %23 : vector<1x128xf32>
      %25 = vector.broadcast %24 : vector<1x128xf32> to vector<16x128xf32>
      %26 = arith.mulf %21, %25 : vector<16x128xf32>
      %cst_10 = arith.constant 0.000000e+00 : f32
      %27 = vector.broadcast %cst_10 : f32 to vector<16x128xf32>
      %28 = arith.cmpf oge, %26, %27 : vector<16x128xf32>
      %cst_11 = arith.constant 2.23606801 : f32
      %29 = vector.broadcast %cst_11 : f32 to vector<16x128xf32>
      %30 = arith.mulf %29, %26 : vector<16x128xf32>
      %31 = arith.select %28, %26, %30 : vector<16x128xi1>, vector<16x128xf32>
      %c0_12 = arith.constant 0 : index
      %c0_13 = arith.constant 0 : index
      %32 = vector.load %arg11[%c0_12, %c0_13] : memref<128x128xf32, #tpu.memory_space<vmem>>, vector<128x128xf32>
      %cst_14 = arith.constant dense<0.000000e+00> : vector<16x128xf32>
      %33 = tpu.matmul %31, %32, %cst_14 {dimension_numbers = #tpu.dot_dimension_numbers<[1], [0], [0], [1], [0, 0, 1, 1], [], []>} : vector<16x128xf32>, vector<128x128xf32>, vector<16x128xf32> -> vector<16x128xf32>
      %cst_15 = arith.constant dense<0.000000e+00> : vector<128xf32>
      %34 = vector.multi_reduction <add>, %33, %cst_15 [0] : vector<16x128xf32> to vector<128xf32>
      %35 = vector.shape_cast %34 : vector<128xf32> to vector<1x128xf32>
      %cst_16 = arith.constant 1.600000e+01 : f32
      %36 = vector.broadcast %cst_16 : f32 to vector<1x128xf32>
      %37 = arith.divf %35, %36 : vector<1x128xf32>
      %38 = vector.broadcast %37 : vector<1x128xf32> to vector<16x128xf32>
      %39 = arith.subf %33, %38 : vector<16x128xf32>
      %40 = arith.mulf %39, %39 : vector<16x128xf32>
      %cst_17 = arith.constant dense<0.000000e+00> : vector<128xf32>
      %41 = vector.multi_reduction <add>, %40, %cst_17 [0] : vector<16x128xf32> to vector<128xf32>
      %42 = vector.shape_cast %41 : vector<128xf32> to vector<1x128xf32>
      %cst_18 = arith.constant 1.600000e+01 : f32
      %43 = vector.broadcast %cst_18 : f32 to vector<1x128xf32>
      %44 = arith.divf %42, %43 : vector<1x128xf32>
      %45 = vector.broadcast %37 : vector<1x128xf32> to vector<16x128xf32>
      %46 = arith.subf %33, %45 : vector<16x128xf32>
      %cst_19 = arith.constant 9.99999974E-6 : f32
      %47 = vector.broadcast %cst_19 : f32 to vector<1x128xf32>
      %48 = arith.addf %44, %47 : vector<1x128xf32>
      %49 = math.rsqrt %48 : vector<1x128xf32>
      %50 = vector.broadcast %49 : vector<1x128xf32> to vector<16x128xf32>
      %51 = arith.mulf %46, %50 : vector<16x128xf32>
      %cst_20 = arith.constant 0.000000e+00 : f32
      %52 = vector.broadcast %cst_20 : f32 to vector<16x128xf32>
      %53 = arith.cmpf oge, %51, %52 : vector<16x128xf32>
      %cst_21 = arith.constant 2.23606801 : f32
      %54 = vector.broadcast %cst_21 : f32 to vector<16x128xf32>
      %55 = arith.mulf %54, %51 : vector<16x128xf32>
      %56 = arith.select %53, %51, %55 : vector<16x128xi1>, vector<16x128xf32>
      %c0_22 = arith.constant 0 : index
      %c0_23 = arith.constant 0 : index
      %57 = vector.load %arg12[%c0_22, %c0_23] : memref<128x128xf32, #tpu.memory_space<vmem>>, vector<128x128xf32>
      %cst_24 = arith.constant dense<0.000000e+00> : vector<16x128xf32>
      %58 = tpu.matmul %56, %57, %cst_24 {dimension_numbers = #tpu.dot_dimension_numbers<[1], [0], [0], [1], [0, 0, 1, 1], [], []>} : vector<16x128xf32>, vector<128x128xf32>, vector<16x128xf32> -> vector<16x128xf32>
      %c0_25 = arith.constant 0 : index
      %c0_26 = arith.constant 0 : index
      %59 = vector.load %arg9[%c0_25, %c0_26] : memref<8x16xf32, #tpu.memory_space<vmem>>, vector<8x16xf32>
      %cst_27 = arith.constant dense<0.000000e+00> : vector<16xf32>
      %60 = vector.multi_reduction <add>, %59, %cst_27 [0] : vector<8x16xf32> to vector<16xf32>
      %61 = vector.shape_cast %60 : vector<16xf32> to vector<1x16xf32>
      %cst_28 = arith.constant 8.000000e+00 : f32
      %62 = vector.broadcast %cst_28 : f32 to vector<1x16xf32>
      %63 = arith.divf %61, %62 : vector<1x16xf32>
      %64 = vector.broadcast %63 : vector<1x16xf32> to vector<8x16xf32>
      %65 = arith.subf %59, %64 : vector<8x16xf32>
      %66 = arith.mulf %65, %65 : vector<8x16xf32>
      %cst_29 = arith.constant dense<0.000000e+00> : vector<16xf32>
      %67 = vector.multi_reduction <add>, %66, %cst_29 [0] : vector<8x16xf32> to vector<16xf32>
      %68 = vector.shape_cast %67 : vector<16xf32> to vector<1x16xf32>
      %cst_30 = arith.constant 8.000000e+00 : f32
      %69 = vector.broadcast %cst_30 : f32 to vector<1x16xf32>
      %70 = arith.divf %68, %69 : vector<1x16xf32>
      %71 = vector.broadcast %63 : vector<1x16xf32> to vector<8x16xf32>
      %72 = arith.subf %59, %71 : vector<8x16xf32>
      %cst_31 = arith.constant 9.99999974E-6 : f32
      %73 = vector.broadcast %cst_31 : f32 to vector<1x16xf32>
      %74 = arith.addf %70, %73 : vector<1x16xf32>
      %75 = math.rsqrt %74 : vector<1x16xf32>
      %76 = vector.broadcast %75 : vector<1x16xf32> to vector<8x16xf32>
      %77 = arith.mulf %72, %76 : vector<8x16xf32>
      %cst_32 = arith.constant dense<0.000000e+00> : vector<8x128xf32>
      %78 = tpu.matmul %77, %58, %cst_32 {dimension_numbers = #tpu.dot_dimension_numbers<[1], [0], [0], [1], [0, 0, 1, 1], [], []>} : vector<8x16xf32>, vector<16x128xf32>, vector<8x128xf32> -> vector<8x128xf32>
      %c0_33 = arith.constant 0 : index
      %c0_34 = arith.constant 0 : index
      %79 = vector.load %arg13[%c0_33, %c0_34] : memref<1x128xf32, #tpu.memory_space<vmem>>, vector<1x128xf32>
      %80 = vector.broadcast %79 : vector<1x128xf32> to vector<8x128xf32>
      %81 = arith.addf %78, %80 : vector<8x128xf32>
      %cst_35 = arith.constant dense<0.000000e+00> : vector<128xf32>
      %82 = vector.multi_reduction <add>, %81, %cst_35 [0] : vector<8x128xf32> to vector<128xf32>
      %83 = vector.shape_cast %82 : vector<128xf32> to vector<1x128xf32>
      %cst_36 = arith.constant 8.000000e+00 : f32
      %84 = vector.broadcast %cst_36 : f32 to vector<1x128xf32>
      %85 = arith.divf %83, %84 : vector<1x128xf32>
      %86 = vector.broadcast %85 : vector<1x128xf32> to vector<8x128xf32>
      %87 = arith.subf %81, %86 : vector<8x128xf32>
      %88 = arith.mulf %87, %87 : vector<8x128xf32>
      %cst_37 = arith.constant dense<0.000000e+00> : vector<128xf32>
      %89 = vector.multi_reduction <add>, %88, %cst_37 [0] : vector<8x128xf32> to vector<128xf32>
      %90 = vector.shape_cast %89 : vector<128xf32> to vector<1x128xf32>
      %cst_38 = arith.constant 8.000000e+00 : f32
      %91 = vector.broadcast %cst_38 : f32 to vector<1x128xf32>
      %92 = arith.divf %90, %91 : vector<1x128xf32>
      %93 = vector.broadcast %85 : vector<1x128xf32> to vector<8x128xf32>
      %94 = arith.subf %81, %93 : vector<8x128xf32>
      %cst_39 = arith.constant 9.99999974E-6 : f32
      %95 = vector.broadcast %cst_39 : f32 to vector<1x128xf32>
      %96 = arith.addf %92, %95 : vector<1x128xf32>
      %97 = math.rsqrt %96 : vector<1x128xf32>
      %98 = vector.broadcast %97 : vector<1x128xf32> to vector<8x128xf32>
      %99 = arith.mulf %94, %98 : vector<8x128xf32>
      %cst_40 = arith.constant 0.000000e+00 : f32
      %100 = vector.broadcast %cst_40 : f32 to vector<8x128xf32>
      %101 = arith.cmpf oge, %99, %100 : vector<8x128xf32>
      %cst_41 = arith.constant 2.23606801 : f32
      %102 = vector.broadcast %cst_41 : f32 to vector<8x128xf32>
      %103 = arith.mulf %102, %99 : vector<8x128xf32>
      %104 = arith.select %101, %99, %103 : vector<8x128xi1>, vector<8x128xf32>
      %c0_42 = arith.constant 0 : index
      %c0_43 = arith.constant 0 : index
      %105 = vector.load %arg14[%c0_42, %c0_43] : memref<128x128xf32, #tpu.memory_space<vmem>>, vector<128x128xf32>
      %cst_44 = arith.constant dense<0.000000e+00> : vector<8x128xf32>
      %106 = tpu.matmul %104, %105, %cst_44 {dimension_numbers = #tpu.dot_dimension_numbers<[1], [0], [0], [1], [0, 0, 1, 1], [], []>} : vector<8x128xf32>, vector<128x128xf32>, vector<8x128xf32> -> vector<8x128xf32>
      %c0_45 = arith.constant 0 : index
      %c0_46 = arith.constant 0 : index
      %107 = vector.load %arg15[%c0_45, %c0_46] : memref<1x128xf32, #tpu.memory_space<vmem>>, vector<1x128xf32>
      %108 = vector.broadcast %107 : vector<1x128xf32> to vector<8x128xf32>
      %109 = arith.addf %106, %108 : vector<8x128xf32>
      %cst_47 = arith.constant dense<0.000000e+00> : vector<128xf32>
      %110 = vector.multi_reduction <add>, %109, %cst_47 [0] : vector<8x128xf32> to vector<128xf32>
      %111 = vector.shape_cast %110 : vector<128xf32> to vector<1x128xf32>
      %cst_48 = arith.constant 8.000000e+00 : f32
      %112 = vector.broadcast %cst_48 : f32 to vector<1x128xf32>
      %113 = arith.divf %111, %112 : vector<1x128xf32>
      %114 = vector.broadcast %113 : vector<1x128xf32> to vector<8x128xf32>
      %115 = arith.subf %109, %114 : vector<8x128xf32>
      %116 = arith.mulf %115, %115 : vector<8x128xf32>
      %cst_49 = arith.constant dense<0.000000e+00> : vector<128xf32>
      %117 = vector.multi_reduction <add>, %116, %cst_49 [0] : vector<8x128xf32> to vector<128xf32>
      %118 = vector.shape_cast %117 : vector<128xf32> to vector<1x128xf32>
      %cst_50 = arith.constant 8.000000e+00 : f32
      %119 = vector.broadcast %cst_50 : f32 to vector<1x128xf32>
      %120 = arith.divf %118, %119 : vector<1x128xf32>
      %121 = vector.broadcast %113 : vector<1x128xf32> to vector<8x128xf32>
      %122 = arith.subf %109, %121 : vector<8x128xf32>
      %cst_51 = arith.constant 9.99999974E-6 : f32
      %123 = vector.broadcast %cst_51 : f32 to vector<1x128xf32>
      %124 = arith.addf %120, %123 : vector<1x128xf32>
      %125 = math.rsqrt %124 : vector<1x128xf32>
      %126 = vector.broadcast %125 : vector<1x128xf32> to vector<8x128xf32>
      %127 = arith.mulf %122, %126 : vector<8x128xf32>
      %cst_52 = arith.constant 0.000000e+00 : f32
      %128 = vector.broadcast %cst_52 : f32 to vector<8x128xf32>
      %129 = arith.cmpf oge, %127, %128 : vector<8x128xf32>
      %cst_53 = arith.constant 2.23606801 : f32
      %130 = vector.broadcast %cst_53 : f32 to vector<8x128xf32>
      %131 = arith.mulf %130, %127 : vector<8x128xf32>
      %132 = arith.select %129, %127, %131 : vector<8x128xi1>, vector<8x128xf32>
      %c0_54 = arith.constant 0 : index
      %c0_55 = arith.constant 0 : index
      %133 = vector.load %arg16[%c0_54, %c0_55] : memref<128x128xf32, #tpu.memory_space<vmem>>, vector<128x128xf32>
      %cst_56 = arith.constant dense<0.000000e+00> : vector<8x128xf32>
      %134 = tpu.matmul %132, %133, %cst_56 {dimension_numbers = #tpu.dot_dimension_numbers<[1], [0], [0], [1], [0, 0, 1, 1], [], []>} : vector<8x128xf32>, vector<128x128xf32>, vector<8x128xf32> -> vector<8x128xf32>
      %c0_57 = arith.constant 0 : index
      %c0_58 = arith.constant 0 : index
      %135 = vector.load %arg17[%c0_57, %c0_58] : memref<1x128xf32, #tpu.memory_space<vmem>>, vector<1x128xf32>
      %136 = vector.broadcast %135 : vector<1x128xf32> to vector<8x128xf32>
      %137 = arith.addf %134, %136 : vector<8x128xf32>
      %c0_59 = arith.constant 0 : index
      %c0_60 = arith.constant 0 : index
      %c0_61 = arith.constant 0 : index
      %138 = vector.load %arg18[%c0_59, %c0_60, %c0_61] : memref<1x8x128xf32, #tpu.memory_space<vmem>>, vector<1x8x128xf32>
      %139 = vector.shape_cast %138 : vector<1x8x128xf32> to vector<8x128xf32>
      %140 = vector.shape_cast %137 : vector<8x128xf32> to vector<1x8x128xf32>
      tpu.vector_store %arg18[%c0_59, %c0_60, %c0_61], %140 {strides = array<i32>} : memref<1x8x128xf32, #tpu.memory_space<vmem>>, vector<1x8x128xf32>,
    } else {
    }
    return
  }
  func.func @transform_0(%arg0: i32) -> (i32, i32) {
    %c0_i32 = arith.constant 0 : i32
    %c0_i32_0 = arith.constant 0 : i32
    %c0_i32_1 = arith.constant 0 : i32
    return %c0_i32, %c0_i32_0 : i32, i32
  }
  func.func @transform_1(%arg0: i32) -> (i32, i32) {
    %c0_i32 = arith.constant 0 : i32
    %c0_i32_0 = arith.constant 0 : i32
    %c0_i32_1 = arith.constant 0 : i32
    return %c0_i32, %c0_i32_0 : i32, i32
  }
  func.func @transform_2(%arg0: i32) -> (i32, i32) {
    %c0_i32 = arith.constant 0 : i32
    %c0_i32_0 = arith.constant 0 : i32
    %c0_i32_1 = arith.constant 0 : i32
    return %c0_i32, %c0_i32_0 : i32, i32
  }
  func.func @transform_3(%arg0: i32) -> (i32, i32) {
    %c0_i32 = arith.constant 0 : i32
    %c0_i32_0 = arith.constant 0 : i32
    %c0_i32_1 = arith.constant 0 : i32
    return %c0_i32, %c0_i32_0 : i32, i32
  }
  func.func @transform_4(%arg0: i32) -> (i32, i32) {
    %c0_i32 = arith.constant 0 : i32
    %c0_i32_0 = arith.constant 0 : i32
    %c0_i32_1 = arith.constant 0 : i32
    return %c0_i32, %c0_i32_0 : i32, i32
  }
  func.func @transform_5(%arg0: i32) -> (i32, i32) {
    %c0_i32 = arith.constant 0 : i32
    %c0_i32_0 = arith.constant 0 : i32
    %c0_i32_1 = arith.constant 0 : i32
    return %c0_i32, %c0_i32_0 : i32, i32
  }
  func.func @transform_6(%arg0: i32) -> (i32, i32) {
    %c0_i32 = arith.constant 0 : i32
    %c0_i32_0 = arith.constant 0 : i32
    %c0_i32_1 = arith.constant 0 : i32
    return %c0_i32, %c0_i32_0 : i32, i32
  }
  func.func @transform_7(%arg0: i32) -> (i32, i32) {
    %c0_i32 = arith.constant 0 : i32
    %c0_i32_0 = arith.constant 0 : i32
    %c0_i32_1 = arith.constant 0 : i32
    return %c0_i32, %c0_i32_0 : i32, i32
  }
  func.func @transform_8(%arg0: i32) -> (i32, i32) {
    %c0_i32 = arith.constant 0 : i32
    %c0_i32_0 = arith.constant 0 : i32
    %c0_i32_1 = arith.constant 0 : i32
    return %c0_i32, %c0_i32_0 : i32, i32
  }
  func.func @transform_9(%arg0: i32) -> (i32, i32) {
    %c0_i32 = arith.constant 0 : i32
    %c0_i32_0 = arith.constant 0 : i32
    %c0_i32_1 = arith.constant 0 : i32
    return %c0_i32, %c0_i32_0 : i32, i32
  }
  func.func @transform_10(%arg0: i32) -> (i32, i32) {
    %c0_i32 = arith.constant 0 : i32
    %c0_i32_0 = arith.constant 0 : i32
    %c0_i32_1 = arith.constant 0 : i32
    return %c0_i32, %c0_i32_0 : i32, i32
  }
  func.func @transform_11(%arg0: i32) -> (i32, i32) {
    %c0_i32 = arith.constant 0 : i32
    %c0_i32_0 = arith.constant 0 : i32
    %c0_i32_1 = arith.constant 0 : i32
    return %c0_i32, %c0_i32_0 : i32, i32
  }
  func.func @transform_12(%arg0: i32) -> (i32, i32) {
    %c0_i32 = arith.constant 0 : i32
    %c0_i32_0 = arith.constant 0 : i32
    %c0_i32_1 = arith.constant 0 : i32
    return %c0_i32, %c0_i32_0 : i32, i32
  }
  func.func @transform_13(%arg0: i32) -> (i32, i32) {
    %c0_i32 = arith.constant 0 : i32
    %c0_i32_0 = arith.constant 0 : i32
    %c0_i32_1 = arith.constant 0 : i32
    return %c0_i32, %c0_i32_0 : i32, i32
  }
  func.func @transform_14(%arg0: i32) -> (i32, i32) {
    %c0_i32 = arith.constant 0 : i32
    %c0_i32_0 = arith.constant 0 : i32
    %c0_i32_1 = arith.constant 0 : i32
    return %c0_i32, %c0_i32_0 : i32, i32
  }
  func.func @transform_15(%arg0: i32) -> (i32, i32) {
    %c0_i32 = arith.constant 0 : i32
    %c0_i32_0 = arith.constant 0 : i32
    %c0_i32_1 = arith.constant 0 : i32
    return %c0_i32, %c0_i32_0 : i32, i32
  }
  func.func @transform_16(%arg0: i32) -> (i32, i32) {
    %c0_i32 = arith.constant 0 : i32
    %c0_i32_0 = arith.constant 0 : i32
    %c0_i32_1 = arith.constant 0 : i32
    return %c0_i32, %c0_i32_0 : i32, i32
  }
  func.func @transform_17(%arg0: i32) -> (i32, i32, i32) {
    %c0_i32 = arith.constant 0 : i32
    %c0_i32_0 = arith.constant 0 : i32
    %c0_i32_1 = arith.constant 0 : i32
    return %arg0, %c0_i32, %c0_i32_0 : i32, i32, i32
  }
}

</mosaic_0001>

<llo_original>
// kernel: ddcca_forward.1
$region0: #{ddcca_forward.1}
  #allocation0 [shape = 'u32[]', space=smem, size = 0x4, offset = 0x4, fixed_abs, tag = 'smem constant byte address 0x4 - core index']
  #allocation1 [shape = 'u32[144,128]{1,0:T(1,128)}', space=vmem, size = 0x12000, scoped, tag = 'internal scratch']
  %s0 = inlined_call_operand.vmem [shape: f32[8,16], index: 0, kind: input, shape index: {}]
  %s1 = inlined_call_operand.vmem [shape: f32[16,128], index: 1, kind: input, shape index: {}]
  %s2 = inlined_call_operand.vmem [shape: f32[1,128], index: 2, kind: input, shape index: {}]
  %s3 = inlined_call_operand.hbm [shape: f32[128,128], index: 3, kind: input, shape index: {}]
  %s4 = inlined_call_operand.vmem [shape: f32[1,128], index: 4, kind: input, shape index: {}]
  %s5 = inlined_call_operand.hbm [shape: f32[128,128], index: 5, kind: input, shape index: {}]
  %s6 = inlined_call_operand.vmem [shape: f32[1,128], index: 6, kind: input, shape index: {}]
  %s7 = inlined_call_operand.vmem [shape: f32[16,8], index: 7, kind: input, shape index: {}]
  %s8 = inlined_call_operand.hbm [shape: f32[8,16], index: 8, kind: input, shape index: {}]
  %s9 = inlined_call_operand.hbm [shape: f32[8,128], index: 9, kind: input, shape index: {}]
  %s10 = inlined_call_operand.hbm [shape: f32[128,128], index: 10, kind: input, shape index: {}]
  %s11 = inlined_call_operand.hbm [shape: f32[128,128], index: 11, kind: input, shape index: {}]
  %s12 = inlined_call_operand.vmem [shape: f32[1,128], index: 12, kind: input, shape index: {}]
  %s13 = inlined_call_operand.hbm [shape: f32[128,128], index: 13, kind: input, shape index: {}]
  %s14 = inlined_call_operand.vmem [shape: f32[1,128], index: 14, kind: input, shape index: {}]
  %s15 = inlined_call_operand.hbm [shape: f32[128,128], index: 15, kind: input, shape index: {}]
  %s16 = inlined_call_operand.vmem [shape: f32[1,128], index: 16, kind: input, shape index: {}]
  %s17 = inlined_call_operand.vmem [shape: f32[2,8,128], index: 17, kind: output, shape index: {}]
  %s18 = sld [smem:[#allocation0]]
  $region141: #{ddcca_forward.1} parent=0
    _
  %s20 = ssub.s32 1, %s18
  %s21 = scalar_select 0, %s20, %s18
  $region1: #{ddcca_forward.1} parent=0
    #allocation2 [shape = 'u8[65536]{0}', space=vmem, size = 0x10000, scoped, tag = 'input window, operand 3, single buffered']
    #allocation3 [shape = 's32[2]{0}', space=sflag, size = 0x8, scoped, tag = 'scoped memory for ddcca_forward.1']
    #allocation4 [shape = 'u8[65536]{0}', space=vmem, size = 0x10000, scoped, tag = 'input window, operand 5, single buffered']
    #allocation5 [shape = 's32[1]{0}', space=sflag, size = 0x4, scoped, tag = 'scoped memory for ddcca_forward.1']
    #allocation6 [shape = 'u8[4096]{0}', space=vmem, size = 0x1000, scoped, tag = 'input window, operand 8, single buffered']
    #allocation7 [shape = 'u8[4096]{0}', space=vmem, size = 0x1000, scoped, tag = 'input window, operand 9, single buffered']
    #allocation8 [shape = 's32[1]{0}', space=sflag, size = 0x4, scoped, tag = 'scoped memory for ddcca_forward.1']
    #allocation9 [shape = 'u8[65536]{0}', space=vmem, size = 0x10000, scoped, tag = 'input window, operand 10, single buffered']
    #allocation10 [shape = 'u8[65536]{0}', space=vmem, size = 0x10000, scoped, tag = 'input window, operand 11, single buffered']
    #allocation11 [shape = 's32[1]{0}', space=sflag, size = 0x4, scoped, tag = 'scoped memory for ddcca_forward.1']
    #allocation12 [shape = 'u8[65536]{0}', space=vmem, size = 0x10000, scoped, tag = 'input window, operand 13, single buffered']
    #allocation13 [shape = 'u8[65536]{0}', space=vmem, size = 0x10000, scoped, tag = 'input window, operand 15, single buffered']
    #allocation14 [shape = 's32[1]{0}', space=sflag, size = 0x4, scoped, tag = 'scoped memory for ddcca_forward.1']
    %22 = vsyncpa [#allocation3], 0
    %23 = vsyncpa [#allocation5], 0
    %24 = vsyncpa [#allocation8], 0
    %25 = vsyncpa [#allocation11], 0
    %26 = vsyncpa [#allocation14], 0
    loop: start=0, step=1, limit=4
    $region2: #{ddcca_forward.1} parent=1 // loop_pre_header
      _
    $region3: #{ddcca_forward.1} parent=1 // loop_header
      %s28 = sphi 0, %s32
      %p29 = scmp.ge.s32.totalorder %s28, 4
      %s36 = sphi 0, %s36
      %s38 = sphi 0, %s36
      %s39 = sphi 0, %s38
      %s53 = sphi 0, %s39
      %s57 = sphi 0, %s57
      %s59 = sphi 0, %s57
      %s60 = sphi 0, %s59
      %s74 = sphi 0, %s60
      %s78 = sphi 0, %s78
      %s80 = sphi 0, %s78
      %s81 = sphi 0, %s80
      %s95 = sphi 0, %s81
      %s99 = sphi 0, %s99
      %s101 = sphi 0, %s99
      %s102 = sphi 0, %s101
      %s116 = sphi 0, %s102
      %s120 = sphi 0, %s120
      %s122 = sphi 0, %s120
      %s123 = sphi 0, %s122
      %s137 = sphi 0, %s123
      %s141 = sphi 0, %s141
      %s143 = sphi 0, %s141
      %s144 = sphi 0, %s143
      %s158 = sphi 0, %s144
      %s162 = sphi 0, %s162
      %s164 = sphi 0, %s162
      %s165 = sphi 0, %s164
      %s179 = sphi 0, %s165
      %s183 = sphi 0, %s183
      %s185 = sphi 0, %s183
      %s186 = sphi 0, %s185
      %s200 = sphi 0, %s186
      %s204 = sphi 0, %s204
      %s206 = sphi 0, %s204
      %s207 = sphi 0, %s206
      %s221 = sphi 0, %s207
      %s225 = sphi 0, %s225
      %s227 = sphi 0, %s225
      %s228 = sphi 0, %s227
      %s242 = sphi 0, %s228
      %s246 = sphi 0, %s246
      %s248 = sphi 0, %s246
      %s249 = sphi 0, %s248
      %s263 = sphi 0, %s249
      %s267 = sphi 0, %s267
      %s269 = sphi 0, %s267
      %s270 = sphi 0, %s269
      %s284 = sphi 0, %s270
      %s288 = sphi 0, %s288
      %s290 = sphi 0, %s288
      %s291 = sphi 0, %s290
      %s305 = sphi 0, %s291
      %s309 = sphi 0, %s309
      %s311 = sphi 0, %s309
      %s312 = sphi 0, %s311
      %s326 = sphi 0, %s312
      %s330 = sphi 0, %s330
      %s332 = sphi 0, %s330
      %s333 = sphi 0, %s332
      %s347 = sphi 0, %s333
      %s351 = sphi 0, %s351
      %s353 = sphi 0, %s351
      %s354 = sphi 0, %s353
      %s368 = sphi 0, %s354
      %s372 = sphi 0, %s372
      %s374 = sphi 0, %s372
      %s375 = sphi 0, %s374
      %s389 = sphi 0, %s375
      %s395 = sphi 0, %s397
      %s398 = sphi 0, %s395
      %s399 = sphi 0, %s398
      %s415 = sphi 0, %s399
    $region4: #{ddcca_forward.1} parent=1 // loop_header_branch
      %31 = sbr.rel (%p29) target = $region8
    $region5: #{ddcca_forward.1} parent=1 // loop_body
      %s33 = ssub.s32 %s28, 1
      %s34 = ssub.s32 %s28, 2
      %s35 = sadd.s32 %s28, 1
      %s37 = sadd.s32 %s36, 1
      %p40 = scmp.eq.s32.totalorder %s28, 1
      %p41 = scmp.ne.s32.totalorder %s36, %s38
      %p42 = scmp.eq.s32.totalorder %s28, 0
      %p43 = por %p41, %p42
      %p44 = scmp.ne.s32.totalorder %s36, %s38
      %p45 = scmp.eq.s32.totalorder %s33, 1
      %p46 = por %p44, %p45
      %p47 = scmp.ne.s32.totalorder %s38, %s39
      %p48 = scmp.eq.s32.totalorder %s33, 0
      %p49 = por %p47, %p48
      %p50 = scmp.ne.s32.totalorder %s38, %s39
      %p51 = scmp.eq.s32.totalorder %s34, 1
      %p52 = por %p50, %p51
      %p54 = scmp.ne.s32.totalorder %s39, %s53
      %p55 = scmp.eq.s32.totalorder %s34, 0
      %p56 = por %p54, %p55
      %s58 = sadd.s32 %s57, 1
      %p61 = scmp.eq.s32.totalorder %s28, 1
      %p62 = scmp.ne.s32.totalorder %s57, %s59
      %p63 = scmp.eq.s32.totalorder %s28, 0
      %p64 = por %p62, %p63
      %p65 = scmp.ne.s32.totalorder %s57, %s59
      %p66 = scmp.eq.s32.totalorder %s33, 1
      %p67 = por %p65, %p66
      %p68 = scmp.ne.s32.totalorder %s59, %s60
      %p69 = scmp.eq.s32.totalorder %s33, 0
      %p70 = por %p68, %p69
      %p71 = scmp.ne.s32.totalorder %s59, %s60
      %p72 = scmp.eq.s32.totalorder %s34, 1
      %p73 = por %p71, %p72
      %p75 = scmp.ne.s32.totalorder %s60, %s74
      %p76 = scmp.eq.s32.totalorder %s34, 0
      %p77 = por %p75, %p76
      %s79 = sadd.s32 %s78, 1
      %p82 = scmp.eq.s32.totalorder %s28, 1
      %p83 = scmp.ne.s32.totalorder %s78, %s80
      %p84 = scmp.eq.s32.totalorder %s28, 0
      %p85 = por %p83, %p84
      %p86 = scmp.ne.s32.totalorder %s78, %s80
      %p87 = scmp.eq.s32.totalorder %s33, 1
      %p88 = por %p86, %p87
      %p89 = scmp.ne.s32.totalorder %s80, %s81
      %p90 = scmp.eq.s32.totalorder %s33, 0
      %p91 = por %p89, %p90
      %p92 = scmp.ne.s32.totalorder %s80, %s81
      %p93 = scmp.eq.s32.totalorder %s34, 1
      %p94 = por %p92, %p93
      %p96 = scmp.ne.s32.totalorder %s81, %s95
      %p97 = scmp.eq.s32.totalorder %s34, 0
      %p98 = por %p96, %p97
      %s100 = sadd.s32 %s99, 1
      %p103 = scmp.eq.s32.totalorder %s28, 1
      %p104 = scmp.ne.s32.totalorder %s99, %s101
      %p105 = scmp.eq.s32.totalorder %s28, 0
      %p106 = por %p104, %p105
      %p107 = scmp.ne.s32.totalorder %s99, %s101
      %p108 = scmp.eq.s32.totalorder %s33, 1
      %p109 = por %p107, %p108
      %p110 = scmp.ne.s32.totalorder %s101, %s102
      %p111 = scmp.eq.s32.totalorder %s33, 0
      %p112 = por %p110, %p111
      %p113 = scmp.ne.s32.totalorder %s101, %s102
      %p114 = scmp.eq.s32.totalorder %s34, 1
      %p115 = por %p113, %p114
      %p117 = scmp.ne.s32.totalorder %s102, %s116
      %p118 = scmp.eq.s32.totalorder %s34, 0
      %p119 = por %p117, %p118
      %s121 = sadd.s32 %s120, 1
      %p124 = scmp.eq.s32.totalorder %s28, 1
      %p125 = scmp.ne.s32.totalorder %s120, %s122
      %p126 = scmp.eq.s32.totalorder %s28, 0
      %p127 = por %p125, %p126
      %p128 = scmp.ne.s32.totalorder %s120, %s122
      %p129 = scmp.eq.s32.totalorder %s33, 1
      %p130 = por %p128, %p129
      %p131 = scmp.ne.s32.totalorder %s122, %s123
      %p132 = scmp.eq.s32.totalorder %s33, 0
      %p133 = por %p131, %p132
      %p134 = scmp.ne.s32.totalorder %s122, %s123
      %p135 = scmp.eq.s32.totalorder %s34, 1
      %p136 = por %p134, %p135
      %p138 = scmp.ne.s32.totalorder %s123, %s137
      %p139 = scmp.eq.s32.totalorder %s34, 0
      %p140 = por %p138, %p139
      %s142 = sadd.s32 %s141, 1
      %p145 = scmp.eq.s32.totalorder %s28, 1
      %p146 = scmp.ne.s32.totalorder %s141, %s143
      %p147 = scmp.eq.s32.totalorder %s28, 0
      %p148 = por %p146, %p147
      %p149 = scmp.ne.s32.totalorder %s141, %s143
      %p150 = scmp.eq.s32.totalorder %s33, 1
      %p151 = por %p149, %p150
      %p152 = scmp.ne.s32.totalorder %s143, %s144
      %p153 = scmp.eq.s32.totalorder %s33, 0
      %p154 = por %p152, %p153
      %p155 = scmp.ne.s32.totalorder %s143, %s144
      %p156 = scmp.eq.s32.totalorder %s34, 1
      %p157 = por %p155, %p156
      %p159 = scmp.ne.s32.totalorder %s144, %s158
      %p160 = scmp.eq.s32.totalorder %s34, 0
      %p161 = por %p159, %p160
      %s163 = sadd.s32 %s162, 1
      %p166 = scmp.eq.s32.totalorder %s28, 1
      %p167 = scmp.ne.s32.totalorder %s162, %s164
      %p168 = scmp.eq.s32.totalorder %s28, 0
      %p169 = por %p167, %p168
      %p170 = scmp.ne.s32.totalorder %s162, %s164
      %p171 = scmp.eq.s32.totalorder %s33, 1
      %p172 = por %p170, %p171
      %p173 = scmp.ne.s32.totalorder %s164, %s165
      %p174 = scmp.eq.s32.totalorder %s33, 0
      %p175 = por %p173, %p174
      %p176 = scmp.ne.s32.totalorder %s164, %s165
      %p177 = scmp.eq.s32.totalorder %s34, 1
      %p178 = por %p176, %p177
      %p180 = scmp.ne.s32.totalorder %s165, %s179
      %p181 = scmp.eq.s32.totalorder %s34, 0
      %p182 = por %p180, %p181
      %s184 = sadd.s32 %s183, 1
      %p187 = scmp.eq.s32.totalorder %s28, 1
      %p188 = scmp.ne.s32.totalorder %s183, %s185
      %p189 = scmp.eq.s32.totalorder %s28, 0
      %p190 = por %p188, %p189
      %p191 = scmp.ne.s32.totalorder %s183, %s185
      %p192 = scmp.eq.s32.totalorder %s33, 1
      %p193 = por %p191, %p192
      %p194 = scmp.ne.s32.totalorder %s185, %s186
      %p195 = scmp.eq.s32.totalorder %s33, 0
      %p196 = por %p194, %p195
      %p197 = scmp.ne.s32.totalorder %s185, %s186
      %p198 = scmp.eq.s32.totalorder %s34, 1
      %p199 = por %p197, %p198
      %p201 = scmp.ne.s32.totalorder %s186, %s200
      %p202 = scmp.eq.s32.totalorder %s34, 0
      %p203 = por %p201, %p202
      %s205 = sadd.s32 %s204, 1
      %p208 = scmp.eq.s32.totalorder %s28, 1
      %p209 = scmp.ne.s32.totalorder %s204, %s206
      %p210 = scmp.eq.s32.totalorder %s28, 0
      %p211 = por %p209, %p210
      %p212 = scmp.ne.s32.totalorder %s204, %s206
      %p213 = scmp.eq.s32.totalorder %s33, 1
      %p214 = por %p212, %p213
      %p215 = scmp.ne.s32.totalorder %s206, %s207
      %p216 = scmp.eq.s32.totalorder %s33, 0
      %p217 = por %p215, %p216
      %p218 = scmp.ne.s32.totalorder %s206, %s207
      %p219 = scmp.eq.s32.totalorder %s34, 1
      %p220 = por %p218, %p219
      %p222 = scmp.ne.s32.totalorder %s207, %s221
      %p223 = scmp.eq.s32.totalorder %s34, 0
      %p224 = por %p222, %p223
      %s226 = sadd.s32 %s225, 1
      %p229 = scmp.eq.s32.totalorder %s28, 1
      %p230 = scmp.ne.s32.totalorder %s225, %s227
      %p231 = scmp.eq.s32.totalorder %s28, 0
      %p232 = por %p230, %p231
      %p233 = scmp.ne.s32.totalorder %s225, %s227
      %p234 = scmp.eq.s32.totalorder %s33, 1
      %p235 = por %p233, %p234
      %p236 = scmp.ne.s32.totalorder %s227, %s228
      %p237 = scmp.eq.s32.totalorder %s33, 0
      %p238 = por %p236, %p237
      %p239 = scmp.ne.s32.totalorder %s227, %s228
      %p240 = scmp.eq.s32.totalorder %s34, 1
      %p241 = por %p239, %p240
      %p243 = scmp.ne.s32.totalorder %s228, %s242
      %p244 = scmp.eq.s32.totalorder %s34, 0
      %p245 = por %p243, %p244
      %s247 = sadd.s32 %s246, 1
      %p250 = scmp.eq.s32.totalorder %s28, 1
      %p251 = scmp.ne.s32.totalorder %s246, %s248
      %p252 = scmp.eq.s32.totalorder %s28, 0
      %p253 = por %p251, %p252
      %p254 = scmp.ne.s32.totalorder %s246, %s248
      %p255 = scmp.eq.s32.totalorder %s33, 1
      %p256 = por %p254, %p255
      %p257 = scmp.ne.s32.totalorder %s248, %s249
      %p258 = scmp.eq.s32.totalorder %s33, 0
      %p259 = por %p257, %p258
      %p260 = scmp.ne.s32.totalorder %s248, %s249
      %p261 = scmp.eq.s32.totalorder %s34, 1
      %p262 = por %p260, %p261
      %p264 = scmp.ne.s32.totalorder %s249, %s263
      %p265 = scmp.eq.s32.totalorder %s34, 0
      %p266 = por %p264, %p265
      %s268 = sadd.s32 %s267, 1
      %p271 = scmp.eq.s32.totalorder %s28, 1
      %p272 = scmp.ne.s32.totalorder %s267, %s269
      %p273 = scmp.eq.s32.totalorder %s28, 0
      %p274 = por %p272, %p273
      %p275 = scmp.ne.s32.totalorder %s267, %s269
      %p276 = scmp.eq.s32.totalorder %s33, 1
      %p277 = por %p275, %p276
      %p278 = scmp.ne.s32.totalorder %s269, %s270
      %p279 = scmp.eq.s32.totalorder %s33, 0
      %p280 = por %p278, %p279
      %p281 = scmp.ne.s32.totalorder %s269, %s270
      %p282 = scmp.eq.s32.totalorder %s34, 1
      %p283 = por %p281, %p282
      %p285 = scmp.ne.s32.totalorder %s270, %s284
      %p286 = scmp.eq.s32.totalorder %s34, 0
      %p287 = por %p285, %p286
      %s289 = sadd.s32 %s288, 1
      %p292 = scmp.eq.s32.totalorder %s28, 1
      %p293 = scmp.ne.s32.totalorder %s288, %s290
      %p294 = scmp.eq.s32.totalorder %s28, 0
      %p295 = por %p293, %p294
      %p296 = scmp.ne.s32.totalorder %s288, %s290
      %p297 = scmp.eq.s32.totalorder %s33, 1
      %p298 = por %p296, %p297
      %p299 = scmp.ne.s32.totalorder %s290, %s291
      %p300 = scmp.eq.s32.totalorder %s33, 0
      %p301 = por %p299, %p300
      %p302 = scmp.ne.s32.totalorder %s290, %s291
      %p303 = scmp.eq.s32.totalorder %s34, 1
      %p304 = por %p302, %p303
      %p306 = scmp.ne.s32.totalorder %s291, %s305
      %p307 = scmp.eq.s32.totalorder %s34, 0
      %p308 = por %p306, %p307
      %s310 = sadd.s32 %s309, 1
      %p313 = scmp.eq.s32.totalorder %s28, 1
      %p314 = scmp.ne.s32.totalorder %s309, %s311
      %p315 = scmp.eq.s32.totalorder %s28, 0
      %p316 = por %p314, %p315
      %p317 = scmp.ne.s32.totalorder %s309, %s311
      %p318 = scmp.eq.s32.totalorder %s33, 1
      %p319 = por %p317, %p318
      %p320 = scmp.ne.s32.totalorder %s311, %s312
      %p321 = scmp.eq.s32.totalorder %s33, 0
      %p322 = por %p320, %p321
      %p323 = scmp.ne.s32.totalorder %s311, %s312
      %p324 = scmp.eq.s32.totalorder %s34, 1
      %p325 = por %p323, %p324
      %p327 = scmp.ne.s32.totalorder %s312, %s326
      %p328 = scmp.eq.s32.totalorder %s34, 0
      %p329 = por %p327, %p328
      %s331 = sadd.s32 %s330, 1
      %p334 = scmp.eq.s32.totalorder %s28, 1
      %p335 = scmp.ne.s32.totalorder %s330, %s332
      %p336 = scmp.eq.s32.totalorder %s28, 0
      %p337 = por %p335, %p336
      %p338 = scmp.ne.s32.totalorder %s330, %s332
      %p339 = scmp.eq.s32.totalorder %s33, 1
      %p340 = por %p338, %p339
      %p341 = scmp.ne.s32.totalorder %s332, %s333
      %p342 = scmp.eq.s32.totalorder %s33, 0
      %p343 = por %p341, %p342
      %p344 = scmp.ne.s32.totalorder %s332, %s333
      %p345 = scmp.eq.s32.totalorder %s34, 1
      %p346 = por %p344, %p345
      %p348 = scmp.ne.s32.totalorder %s333, %s347
      %p349 = scmp.eq.s32.totalorder %s34, 0
      %p350 = por %p348, %p349
      %s352 = sadd.s32 %s351, 1
      %p355 = scmp.eq.s32.totalorder %s28, 1
      %p356 = scmp.ne.s32.totalorder %s351, %s353
      %p357 = scmp.eq.s32.totalorder %s28, 0
      %p358 = por %p356, %p357
      %p359 = scmp.ne.s32.totalorder %s351, %s353
      %p360 = scmp.eq.s32.totalorder %s33, 1
      %p361 = por %p359, %p360
      %p362 = scmp.ne.s32.totalorder %s353, %s354
      %p363 = scmp.eq.s32.totalorder %s33, 0
      %p364 = por %p362, %p363
      %p365 = scmp.ne.s32.totalorder %s353, %s354
      %p366 = scmp.eq.s32.totalorder %s34, 1
      %p367 = por %p365, %p366
      %p369 = scmp.ne.s32.totalorder %s354, %s368
      %p370 = scmp.eq.s32.totalorder %s34, 0
      %p371 = por %p369, %p370
      %s373 = sadd.s32 %s372, 1
      %p376 = scmp.eq.s32.totalorder %s28, 1
      %p377 = scmp.ne.s32.totalorder %s372, %s374
      %p378 = scmp.eq.s32.totalorder %s28, 0
      %p379 = por %p377, %p378
      %p380 = scmp.ne.s32.totalorder %s372, %s374
      %p381 = scmp.eq.s32.totalorder %s33, 1
      %p382 = por %p380, %p381
      %p383 = scmp.ne.s32.totalorder %s374, %s375
      %p384 = scmp.eq.s32.totalorder %s33, 0
      %p385 = por %p383, %p384
      %p386 = scmp.ne.s32.totalorder %s374, %s375
      %p387 = scmp.eq.s32.totalorder %s34, 1
      %p388 = por %p386, %p387
      %p390 = scmp.ne.s32.totalorder %s375, %s389
      %p391 = scmp.eq.s32.totalorder %s34, 0
      %p392 = por %p390, %p391
      %s393 = ssub.s32 %s28, %s35
      %p394 = scmp.eq.s32.totalorder %s393, 0
      %s396 = sadd.s32 %s395, 1
      %s397 = scalar_select %p394, %s395, %s396
      %p400 = pneg %p394
      %p401 = scmp.eq.s32.totalorder %s28, 1
      %p402 = por %p400, %p401
      %p403 = scmp.ne.s32.totalorder %s395, %s398
      %p404 = scmp.eq.s32.totalorder %s28, 0
      %p405 = por %p403, %p404
      %p406 = scmp.ne.s32.totalorder %s395, %s398
      %p407 = scmp.eq.s32.totalorder %s33, 1
      %p408 = por %p406, %p407
      %p409 = scmp.ne.s32.totalorder %s398, %s399
      %p410 = scmp.eq.s32.totalorder %s33, 0
      %p411 = por %p409, %p410
      %p412 = scmp.ne.s32.totalorder %s398, %s399
      %p413 = scmp.eq.s32.totalorder %s34, 1
      %p414 = por %p412, %p413
      %p416 = scmp.ne.s32.totalorder %s399, %s415
      %p417 = scmp.eq.s32.totalorder %s34, 0
      %p418 = por %p416, %p417
      %p419 = scmp.le.s32.totalorder 1, %s28
      %p420 = scmp.lt.s32.totalorder %s28, 3
      %p421 = pnand %p419, %p420
      %p422 = pneg %p421
      // Predicated region
      $region9: #{ddcca_forward.1} parent=5 // pred_check
        _
      $region10: #{ddcca_forward.1} parent=5 // pred_check_branch
        %424 = sbr.rel (%p421) target = $region12
      $region11: #{ddcca_forward.1} parent=5 // pred_region
        %s425 = ssub.s32 %s28, 1
        // Predicated region
        $region13: #{ddcca_forward.1} parent=11 // pred_check
          %p426 = pneg %p49
        $region14: #{ddcca_forward.1} parent=11 // pred_check_branch
          %428 = sbr.rel (%p426) target = $region16
        $region15: #{ddcca_forward.1} parent=11 // pred_region
          _
        $region16: #{ddcca_forward.1} parent=11 // pred_fallthru
          _
        // Predicated region
        $region17: #{ddcca_forward.1} parent=11 // pred_check
          %p429 = pneg %p70
        $region18: #{ddcca_forward.1} parent=11 // pred_check_branch
          %431 = sbr.rel (%p429) target = $region20
        $region19: #{ddcca_forward.1} parent=11 // pred_region
          _
        $region20: #{ddcca_forward.1} parent=11 // pred_fallthru
          _
        // Predicated region
        $region21: #{ddcca_forward.1} parent=11 // pred_check
          %p432 = pneg %p91
        $region22: #{ddcca_forward.1} parent=11 // pred_check_branch
          %434 = sbr.rel (%p432) target = $region24
        $region23: #{ddcca_forward.1} parent=11 // pred_region
          _
        $region24: #{ddcca_forward.1} parent=11 // pred_fallthru
          _
        // Predicated region
        $region25: #{ddcca_forward.1} parent=11 // pred_check
          %p435 = pneg %p112
        $region26: #{ddcca_forward.1} parent=11 // pred_check_branch
          %437 = sbr.rel (%p435) target = $region28
        $region27: #{ddcca_forward.1} parent=11 // pred_region
          %s439 = ssub.s32 2048, 2048
          %440 = vsyncadd [#allocation3], %s439
          %s441 = sshll.u32 [#allocation2], 4
          %s442 = int_to_ptr.vmem [resolvable:$true] %s441
          %447 = dma.hbm_to_vmem [thread:$0]  %s3, 2048, %s442, [#allocation3], 128, 128, 8
        $region28: #{ddcca_forward.1} parent=11 // pred_fallthru
          _
        // Predicated region
        $region29: #{ddcca_forward.1} parent=11 // pred_check
          %p448 = pneg %p133
        $region30: #{ddcca_forward.1} parent=11 // pred_check_branch
          %450 = sbr.rel (%p448) target = $region32
        $region31: #{ddcca_forward.1} parent=11 // pred_region
          _
        $region32: #{ddcca_forward.1} parent=11 // pred_fallthru
          _
        // Predicated region
        $region33: #{ddcca_forward.1} parent=11 // pred_check
          %p451 = pneg %p154
        $region34: #{ddcca_forward.1} parent=11 // pred_check_branch
          %453 = sbr.rel (%p451) target = $region36
        $region35: #{ddcca_forward.1} parent=11 // pred_region
          %s455 = ssub.s32 2048, 2048
          %456 = vsyncadd [#allocation5], %s455
          %s457 = sshll.u32 [#allocation4], 4
          %s458 = int_to_ptr.vmem [resolvable:$true] %s457
          %463 = dma.hbm_to_vmem [thread:$0]  %s5, 2048, %s458, [#allocation5], 128, 128, 8
        $region36: #{ddcca_forward.1} parent=11 // pred_fallthru
          _
        // Predicated region
        $region37: #{ddcca_forward.1} parent=11 // pred_check
          %p464 = pneg %p175
        $region38: #{ddcca_forward.1} parent=11 // pred_check_branch
          %466 = sbr.rel (%p464) target = $region40
        $region39: #{ddcca_forward.1} parent=11 // pred_region
          _
        $region40: #{ddcca_forward.1} parent=11 // pred_fallthru
          _
        // Predicated region
        $region41: #{ddcca_forward.1} parent=11 // pred_check
          %p467 = pneg %p196
        $region42: #{ddcca_forward.1} parent=11 // pred_check_branch
          %469 = sbr.rel (%p467) target = $region44
        $region43: #{ddcca_forward.1} parent=11 // pred_region
          _
        $region44: #{ddcca_forward.1} parent=11 // pred_fallthru
          _
        // Predicated region
        $region45: #{ddcca_forward.1} parent=11 // pred_check
          %p470 = pneg %p217
        $region46: #{ddcca_forward.1} parent=11 // pred_check_branch
          %472 = sbr.rel (%p470) target = $region48
        $region47: #{ddcca_forward.1} parent=11 // pred_region
          %s474 = ssub.s32 128, 128
          %475 = vsyncadd [#allocation5], %s474
          %s477 = sshll.u32 [#allocation6], 4
          %s478 = int_to_ptr.vmem [resolvable:$true] %s477
          %480 = dma.hbm_to_vmem [thread:$0]  %s8, 128, %s478, [#allocation5]
        $region48: #{ddcca_forward.1} parent=11 // pred_fallthru
          _
        // Predicated region
        $region49: #{ddcca_forward.1} parent=11 // pred_check
          %p481 = pneg %p238
        $region50: #{ddcca_forward.1} parent=11 // pred_check_branch
          %483 = sbr.rel (%p481) target = $region52
        $region51: #{ddcca_forward.1} parent=11 // pred_region
          %s485 = ssub.s32 128, 128
          %486 = vsyncadd [#allocation8], %s485
          %s488 = sshll.u32 [#allocation7], 4
          %s489 = int_to_ptr.vmem [resolvable:$true] %s488
          %491 = dma.hbm_to_vmem [thread:$0]  %s9, 128, %s489, [#allocation8]
        $region52: #{ddcca_forward.1} parent=11 // pred_fallthru
          _
        // Predicated region
        $region53: #{ddcca_forward.1} parent=11 // pred_check
          %p492 = pneg %p259
        $region54: #{ddcca_forward.1} parent=11 // pred_check_branch
          %494 = sbr.rel (%p492) target = $region56
        $region55: #{ddcca_forward.1} parent=11 // pred_region
          %s496 = ssub.s32 2048, 2048
          %497 = vsyncadd [#allocation8], %s496
          %s498 = sshll.u32 [#allocation9], 4
          %s499 = int_to_ptr.vmem [resolvable:$true] %s498
          %504 = dma.hbm_to_vmem [thread:$0]  %s10, 2048, %s499, [#allocation8], 128, 128, 8
        $region56: #{ddcca_forward.1} parent=11 // pred_fallthru
          _
        // Predicated region
        $region57: #{ddcca_forward.1} parent=11 // pred_check
          %p505 = pneg %p280
        $region58: #{ddcca_forward.1} parent=11 // pred_check_branch
          %507 = sbr.rel (%p505) target = $region60
        $region59: #{ddcca_forward.1} parent=11 // pred_region
          %s509 = ssub.s32 2048, 2048
          %510 = vsyncadd [#allocation11], %s509
          %s511 = sshll.u32 [#allocation10], 4
          %s512 = int_to_ptr.vmem [resolvable:$true] %s511
          %517 = dma.hbm_to_vmem [thread:$0]  %s11, 2048, %s512, [#allocation11], 128, 128, 8
        $region60: #{ddcca_forward.1} parent=11 // pred_fallthru
          _
        // Predicated region
        $region61: #{ddcca_forward.1} parent=11 // pred_check
          %p518 = pneg %p301
        $region62: #{ddcca_forward.1} parent=11 // pred_check_branch
          %520 = sbr.rel (%p518) target = $region64
        $region63: #{ddcca_forward.1} parent=11 // pred_region
          _
        $region64: #{ddcca_forward.1} parent=11 // pred_fallthru
          _
        // Predicated region
        $region65: #{ddcca_forward.1} parent=11 // pred_check
          %p521 = pneg %p322
        $region66: #{ddcca_forward.1} parent=11 // pred_check_branch
          %523 = sbr.rel (%p521) target = $region68
        $region67: #{ddcca_forward.1} parent=11 // pred_region
          %s525 = ssub.s32 2048, 2048
          %526 = vsyncadd [#allocation11], %s525
          %s527 = sshll.u32 [#allocation12], 4
          %s528 = int_to_ptr.vmem [resolvable:$true] %s527
          %533 = dma.hbm_to_vmem [thread:$0]  %s13, 2048, %s528, [#allocation11], 128, 128, 8
        $region68: #{ddcca_forward.1} parent=11 // pred_fallthru
          _
        // Predicated region
        $region69: #{ddcca_forward.1} parent=11 // pred_check
          %p534 = pneg %p343
        $region70: #{ddcca_forward.1} parent=11 // pred_check_branch
          %536 = sbr.rel (%p534) target = $region72
        $region71: #{ddcca_forward.1} parent=11 // pred_region
          _
        $region72: #{ddcca_forward.1} parent=11 // pred_fallthru
          _
        // Predicated region
        $region73: #{ddcca_forward.1} parent=11 // pred_check
          %p537 = pneg %p364
        $region74: #{ddcca_forward.1} parent=11 // pred_check_branch
          %539 = sbr.rel (%p537) target = $region76
        $region75: #{ddcca_forward.1} parent=11 // pred_region
          %s541 = ssub.s32 2048, 2048
          %542 = vsyncadd [#allocation14], %s541
          %s543 = sshll.u32 [#allocation13], 4
          %s544 = int_to_ptr.vmem [resolvable:$true] %s543
          %549 = dma.hbm_to_vmem [thread:$0]  %s15, 2048, %s544, [#allocation14], 128, 128, 8
        $region76: #{ddcca_forward.1} parent=11 // pred_fallthru
          _
        // Predicated region
        $region77: #{ddcca_forward.1} parent=11 // pred_check
          %p550 = pneg %p385
        $region78: #{ddcca_forward.1} parent=11 // pred_check_branch
          %552 = sbr.rel (%p550) target = $region80
        $region79: #{ddcca_forward.1} parent=11 // pred_region
          _
        $region80: #{ddcca_forward.1} parent=11 // pred_fallthru
          _
      $region12: #{ddcca_forward.1} parent=5 // pred_fallthru
        _
      %p553 = scmp.lt.s32.totalorder %s28, 2
      // Predicated region
      $region81: #{ddcca_forward.1} parent=5 // pred_check
        %p554 = pneg %p553
      $region82: #{ddcca_forward.1} parent=5 // pred_check_branch
        %556 = sbr.rel (%p554) target = $region84
      $region83: #{ddcca_forward.1} parent=5 // pred_region
        _
      $region84: #{ddcca_forward.1} parent=5 // pred_fallthru
        _
      %p557 = scmp.le.s32.totalorder 1, %s28
      %p558 = scmp.lt.s32.totalorder %s28, 3
      %p559 = pnand %p557, %p558
      %p560 = pneg %p559
      // Predicated region
      $region85: #{ddcca_forward.1} parent=5 // pred_check
        _
      $region86: #{ddcca_forward.1} parent=5 // pred_check_branch
        %562 = sbr.rel (%p559) target = $region88
      $region87: #{ddcca_forward.1} parent=5 // pred_region
        %s563 = ssub.s32 %s28, 1
        // Predicated region
        $region89: #{ddcca_forward.1} parent=87 // pred_check
          %p564 = pneg %p112
        $region90: #{ddcca_forward.1} parent=87 // pred_check_branch
          %566 = sbr.rel (%p564) target = $region92
        $region91: #{ddcca_forward.1} parent=87 // pred_region
          %567 = dma.done [#allocation3], 2048
        $region92: #{ddcca_forward.1} parent=87 // pred_fallthru
          _
        // Predicated region
        $region93: #{ddcca_forward.1} parent=87 // pred_check
          %p568 = pneg %p154
        $region94: #{ddcca_forward.1} parent=87 // pred_check_branch
          %570 = sbr.rel (%p568) target = $region96
        $region95: #{ddcca_forward.1} parent=87 // pred_region
          %571 = dma.done [#allocation5], 2048
        $region96: #{ddcca_forward.1} parent=87 // pred_fallthru
          _
        // Predicated region
        $region97: #{ddcca_forward.1} parent=87 // pred_check
          %p572 = pneg %p217
        $region98: #{ddcca_forward.1} parent=87 // pred_check_branch
          %574 = sbr.rel (%p572) target = $region100
        $region99: #{ddcca_forward.1} parent=87 // pred_region
          %575 = dma.done [#allocation5], 128
        $region100: #{ddcca_forward.1} parent=87 // pred_fallthru
          _
        // Predicated region
        $region101: #{ddcca_forward.1} parent=87 // pred_check
          %p576 = pneg %p238
        $region102: #{ddcca_forward.1} parent=87 // pred_check_branch
          %578 = sbr.rel (%p576) target = $region104
        $region103: #{ddcca_forward.1} parent=87 // pred_region
          %579 = dma.done [#allocation8], 128
        $region104: #{ddcca_forward.1} parent=87 // pred_fallthru
          _
        // Predicated region
        $region105: #{ddcca_forward.1} parent=87 // pred_check
          %p580 = pneg %p259
        $region106: #{ddcca_forward.1} parent=87 // pred_check_branch
          %582 = sbr.rel (%p580) target = $region108
        $region107: #{ddcca_forward.1} parent=87 // pred_region
          %583 = dma.done [#allocation8], 2048
        $region108: #{ddcca_forward.1} parent=87 // pred_fallthru
          _
        // Predicated region
        $region109: #{ddcca_forward.1} parent=87 // pred_check
          %p584 = pneg %p280
        $region110: #{ddcca_forward.1} parent=87 // pred_check_branch
          %586 = sbr.rel (%p584) target = $region112
        $region111: #{ddcca_forward.1} parent=87 // pred_region
          %587 = dma.done [#allocation11], 2048
        $region112: #{ddcca_forward.1} parent=87 // pred_fallthru
          _
        // Predicated region
        $region113: #{ddcca_forward.1} parent=87 // pred_check
          %p588 = pneg %p322
        $region114: #{ddcca_forward.1} parent=87 // pred_check_branch
          %590 = sbr.rel (%p588) target = $region116
        $region115: #{ddcca_forward.1} parent=87 // pred_region
          %591 = dma.done [#allocation11], 2048
        $region116: #{ddcca_forward.1} parent=87 // pred_fallthru
          _
        // Predicated region
        $region117: #{ddcca_forward.1} parent=87 // pred_check
          %p592 = pneg %p364
        $region118: #{ddcca_forward.1} parent=87 // pred_check_branch
          %594 = sbr.rel (%p592) target = $region120
        $region119: #{ddcca_forward.1} parent=87 // pred_region
          %595 = dma.done [#allocation14], 2048
        $region120: #{ddcca_forward.1} parent=87 // pred_fallthru
          _
        %p596 = pneg %p49
        %p597 = pneg %p46
        %p598 = pneg %p70
        %p599 = pneg %p67
        %p600 = pneg %p91
        %p601 = pneg %p88
        %p602 = pneg %p112
        %p603 = pneg %p109
        %p604 = pneg %p133
        %p605 = pneg %p130
        %p606 = pneg %p154
        %p607 = pneg %p151
        %p608 = pneg %p175
        %p609 = pneg %p172
        %p610 = pneg %p196
        %p611 = pneg %p193
        %p612 = pneg %p217
        %p613 = pneg %p214
        %p614 = pneg %p238
        %p615 = pneg %p235
        %p616 = pneg %p259
        %p617 = pneg %p256
        %p618 = pneg %p280
        %p619 = pneg %p277
        %p620 = pneg %p301
        %p621 = pneg %p298
        %p622 = pneg %p322
        %p623 = pneg %p319
        %p624 = pneg %p343
        %p625 = pneg %p340
        %p626 = pneg %p364
        %p627 = pneg %p361
        %p628 = pneg %p385
        %p629 = pneg %p382
        %p630 = pneg %p411
        %p631 = pneg %p408
        %p632 = scmp.lt.s32.totalorder %s33, 1
        %s633 = scalar_select %p632, %s33, 1
        %s634 = smul.addr %s633, 8
        %s635 = scalar_lea.vmem %s17, %s634
        %p636 = scmp.lt.s32.totalorder %s33, 1
        %s637 = scalar_select %p636, %s33, 1
        %s638 = smul.addr %s637, 8
        %s639 = scalar_lea.vmem %s17, %s638
        %p640 = scmp.eq.s32.totalorder %s33, 0
        // Predicated region
        $region121: #{ddcca_forward.1} parent=87 // pred_check
          %p641 = pneg %p640
        $region122: #{ddcca_forward.1} parent=87 // pred_check_branch
          %643 = sbr.rel (%p641) target = $region124
        $region123: #{ddcca_forward.1} parent=87 // pred_region
          %v644 = vld [vmem:[%s0] sm:$0xff]
          %v645 = vld [vmem:[%s1] sm:$0xff]
          %v646 = vld [vmem:[%s1 + $0x8] sm:$0xff]
          %v647 = vld [vmem:[%s2] sm:$0x1]
          %v649 = vlaneseq
          %v650 = vshrl.u32 %v649, 7
          %v651 = vsub.s32 0, %v650
          %v652 = vrot.slane %v647, %v651
          %vm654 = vcmask 130048
          %v656 = vsel %vm654, %v644, 0
          %658 = vmatprep.subr.mxu0 0.0
          %659 = vmatpush1.msra.mxu0 0.0
          %660 = vmatprep.subr.mxu0 0.0
          %661 = vmatpush1.msra.mxu0 0.0
          %662 = vmatprep.subr.mxu0 0.0
          %663 = vmatpush1.msra.mxu0 0.0
          %664 = vmatprep.subr.mxu0 0.0
          %665 = vmatpush1.msra.mxu0 0.0
          %666 = vmatprep.subr.mxu0 0.0
          %667 = vmatpush1.msra.mxu0 0.0
          %668 = vmatprep.subr.mxu0 0.0
          %669 = vmatpush1.msra.mxu0 0.0
          %670 = vmatprep.subr.mxu0 0.0
          %671 = vmatpush1.msra.mxu0 0.0
          %672 = vmatprep.subr.mxu0 0.0
          %673 = vmatpush1.msra.mxu0 0.0
          %674 = vmatprep.subr.mxu0 0.0
          %675 = vmatpush1.msra.mxu0 0.0
          %676 = vmatprep.subr.mxu0 0.0
          %677 = vmatpush1.msra.mxu0 0.0
          %678 = vmatprep.subr.mxu0 0.0
          %679 = vmatpush1.msra.mxu0 0.0
          %680 = vmatprep.subr.mxu0 0.0
          %681 = vmatpush1.msra.mxu0 0.0
          %682 = vmatprep.subr.mxu0 0.0
          %683 = vmatpush1.msra.mxu0 0.0
          %684 = vmatprep.subr.mxu0 0.0
          %685 = vmatpush1.msra.mxu0 0.0
          %686 = vmatprep.subr.mxu0 0.0
          %687 = vmatpush1.msra.mxu0 %v646
          %688 = vmatprep.subr.mxu0 0.0
          %689 = vmatpush1.msra.mxu0 %v645
          %690 = vmatprep.subr.mxu0 0.0
          %691 = vmatpush2.msra.mxu0 0.0
          %692 = vmatprep.subr.mxu0 0.0
          %693 = vmatpush2.msra.mxu0 0.0
          %694 = vmatprep.subr.mxu0 0.0
          %695 = vmatpush2.msra.mxu0 0.0
          %696 = vmatprep.subr.mxu0 0.0
          %697 = vmatpush2.msra.mxu0 0.0
          %698 = vmatprep.subr.mxu0 0.0
          %699 = vmatpush2.msra.mxu0 0.0
          %700 = vmatprep.subr.mxu0 0.0
          %701 = vmatpush2.msra.mxu0 0.0
          %702 = vmatprep.subr.mxu0 0.0
          %703 = vmatpush2.msra.mxu0 0.0
          %704 = vmatprep.subr.mxu0 0.0
          %705 = vmatpush2.msra.mxu0 0.0
          %706 = vmatprep.subr.mxu0 0.0
          %707 = vmatpush2.msra.mxu0 0.0
          %708 = vmatprep.subr.mxu0 0.0
          %709 = vmatpush2.msra.mxu0 0.0
          %710 = vmatprep.subr.mxu0 0.0
          %711 = vmatpush2.msra.mxu0 0.0
          %712 = vmatprep.subr.mxu0 0.0
          %713 = vmatpush2.msra.mxu0 0.0
          %714 = vmatprep.subr.mxu0 0.0
          %715 = vmatpush2.msra.mxu0 0.0
          %716 = vmatprep.subr.mxu0 0.0
          %717 = vmatpush2.msra.mxu0 0.0
          %718 = vmatprep.subr.mxu0 0.0
          %719 = vmatpush2.msra.mxu0 0.0
          %720 = vmatprep.subr.mxu0 0.0
          %721 = vmatpush2.msra.mxu0 0.0
          %722 = vmatprep.mubr.f32.mxu0 0.0
          %723 = vmatmul.mubr.f32.gmra.mxu0 %v656
          %v724 = vpop.f32.mrf.mxu0
          %v725 = vadd.f32 %v652, %v724
          %v726 = vpop.f32.mrf.mxu0
          %727 = vdwg.mxu0
          %v728 = vxor.u32 %v725, 2147483648
          %v729 = vmul.f32 %v728, 1.442695
          %v730 = vpow.pop %v729
          %v731 = vadd.f32 %v730, 1.0
          %v732 = vrcp.pop %v731
          %v733 = vmul.f32 1.0, %v732
          %v734 = vrot.slane %v733, 4
          %v735 = vadd.f32 %v733, %v734
          %v736 = vrot.slane %v735, 2
          %v737 = vadd.f32 %v735, %v736
          %v738 = vrot.slane %v737, 1
          %v739 = vadd.f32 %v737, %v738
          %v740 = vrcp.pop 8.0
          %v741 = vmul.f32 %v739, %v740
          %v742 = vsub.f32 %v733, %v741
          %v743 = vmul.f32 %v742, %v742
          %v744 = vrot.slane %v743, 4
          %v745 = vadd.f32 %v743, %v744
          %v746 = vrot.slane %v745, 2
          %v747 = vadd.f32 %v745, %v746
          %v748 = vrot.slane %v747, 1
          %v749 = vadd.f32 %v747, %v748
          %v750 = vmul.f32 %v749, %v740
          %v751 = vadd.f32 %v750, 1e-05
          %v752 = vrsqrt.pop %v751
          %v753 = vmul.f32 %v742, %v752
          %v754 = vld [vmem:[#allocation2] sm:$0xff]
          %v755 = vld [vmem:[#allocation2 + $0x8] sm:$0xff]
          %v756 = vld [vmem:[#allocation2 + $0x10] sm:$0xff]
          %v757 = vld [vmem:[#allocation2 + $0x18] sm:$0xff]
          %v758 = vld [vmem:[#allocation2 + $0x20] sm:$0xff]
          %v759 = vld [vmem:[#allocation2 + $0x28] sm:$0xff]
          %v760 = vld [vmem:[#allocation2 + $0x30] sm:$0xff]
          %v761 = vld [vmem:[#allocation2 + $0x38] sm:$0xff]
          %v762 = vld [vmem:[#allocation2 + $0x40] sm:$0xff]
          %v763 = vld [vmem:[#allocation2 + $0x48] sm:$0xff]
          %v764 = vld [vmem:[#allocation2 + $0x50] sm:$0xff]
          %v765 = vld [vmem:[#allocation2 + $0x58] sm:$0xff]
          %v766 = vld [vmem:[#allocation2 + $0x60] sm:$0xff]
          %v767 = vld [vmem:[#allocation2 + $0x68] sm:$0xff]
          %v768 = vld [vmem:[#allocation2 + $0x70] sm:$0xff]
          %v769 = vld [vmem:[#allocation2 + $0x78] sm:$0xff]
          %v770 = vld [vmem:[%s4] sm:$0x1]
          %v772 = vlaneseq
          %v773 = vshrl.u32 %v772, 7
          %v774 = vsub.s32 0, %v773
          %v775 = vrot.slane %v770, %v774
          %777 = vmatprep.subr.mxu0 0.0
          %778 = vmatpush1.msra.mxu0 %v769
          %779 = vmatprep.subr.mxu0 0.0
          %780 = vmatpush1.msra.mxu0 %v768
          %781 = vmatprep.subr.mxu0 0.0
          %782 = vmatpush1.msra.mxu0 %v767
          %783 = vmatprep.subr.mxu0 0.0
          %784 = vmatpush1.msra.mxu0 %v766
          %785 = vmatprep.subr.mxu0 0.0
          %786 = vmatpush1.msra.mxu0 %v765
          %787 = vmatprep.subr.mxu0 0.0
          %788 = vmatpush1.msra.mxu0 %v764
          %789 = vmatprep.subr.mxu0 0.0
          %790 = vmatpush1.msra.mxu0 %v763
          %791 = vmatprep.subr.mxu0 0.0
          %792 = vmatpush1.msra.mxu0 %v762
          %793 = vmatprep.subr.mxu0 0.0
          %794 = vmatpush1.msra.mxu0 %v761
          %795 = vmatprep.subr.mxu0 0.0
          %796 = vmatpush1.msra.mxu0 %v760
          %797 = vmatprep.subr.mxu0 0.0
          %798 = vmatpush1.msra.mxu0 %v759
          %799 = vmatprep.subr.mxu0 0.0
          %800 = vmatpush1.msra.mxu0 %v758
          %801 = vmatprep.subr.mxu0 0.0
          %802 = vmatpush1.msra.mxu0 %v757
          %803 = vmatprep.subr.mxu0 0.0
          %804 = vmatpush1.msra.mxu0 %v756
          %805 = vmatprep.subr.mxu0 0.0
          %806 = vmatpush1.msra.mxu0 %v755
          %807 = vmatprep.subr.mxu0 0.0
          %808 = vmatpush1.msra.mxu0 %v754
          %809 = vmatprep.subr.mxu0 0.0
          %810 = vmatpush2.msra.mxu0 0.0
          %811 = vmatprep.subr.mxu0 0.0
          %812 = vmatpush2.msra.mxu0 0.0
          %813 = vmatprep.subr.mxu0 0.0
          %814 = vmatpush2.msra.mxu0 0.0
          %815 = vmatprep.subr.mxu0 0.0
          %816 = vmatpush2.msra.mxu0 0.0
          %817 = vmatprep.subr.mxu0 0.0
          %818 = vmatpush2.msra.mxu0 0.0
          %819 = vmatprep.subr.mxu0 0.0
          %820 = vmatpush2.msra.mxu0 0.0
          %821 = vmatprep.subr.mxu0 0.0
          %822 = vmatpush2.msra.mxu0 0.0
          %823 = vmatprep.subr.mxu0 0.0
          %824 = vmatpush2.msra.mxu0 0.0
          %825 = vmatprep.subr.mxu0 0.0
          %826 = vmatpush2.msra.mxu0 0.0
          %827 = vmatprep.subr.mxu0 0.0
          %828 = vmatpush2.msra.mxu0 0.0
          %829 = vmatprep.subr.mxu0 0.0
          %830 = vmatpush2.msra.mxu0 0.0
          %831 = vmatprep.subr.mxu0 0.0
          %832 = vmatpush2.msra.mxu0 0.0
          %833 = vmatprep.subr.mxu0 0.0
          %834 = vmatpush2.msra.mxu0 0.0
          %835 = vmatprep.subr.mxu0 0.0
          %836 = vmatpush2.msra.mxu0 0.0
          %837 = vmatprep.subr.mxu0 0.0
          %838 = vmatpush2.msra.mxu0 0.0
          %839 = vmatprep.subr.mxu0 0.0
          %840 = vmatpush2.msra.mxu0 0.0
          %841 = vmatprep.mubr.f32.mxu0 0.0
          %842 = vmatmul.mubr.f32.gmra.mxu0 %v753
          %v843 = vpop.f32.mrf.mxu0
          %v844 = vadd.f32 %v775, %v843
          %v845 = vpop.f32.mrf.mxu0
          %846 = vdwg.mxu0
          %v847 = vxor.u32 %v844, 2147483648
          %v848 = vmul.f32 %v847, 1.442695
          %v849 = vpow.pop %v848
          %v850 = vadd.f32 %v849, 1.0
          %v851 = vrcp.pop %v850
          %v852 = vmul.f32 1.0, %v851
          %v853 = vrot.slane %v852, 4
          %v854 = vadd.f32 %v852, %v853
          %v855 = vrot.slane %v854, 2
          %v856 = vadd.f32 %v854, %v855
          %v857 = vrot.slane %v856, 1
          %v858 = vadd.f32 %v856, %v857
          %v859 = vmul.f32 %v858, %v740
          %v860 = vsub.f32 %v852, %v859
          %v861 = vmul.f32 %v860, %v860
          %v862 = vrot.slane %v861, 4
          %v863 = vadd.f32 %v861, %v862
          %v864 = vrot.slane %v863, 2
          %v865 = vadd.f32 %v863, %v864
          %v866 = vrot.slane %v865, 1
          %v867 = vadd.f32 %v865, %v866
          %v868 = vmul.f32 %v867, %v740
          %v869 = vadd.f32 %v868, 1e-05
          %v870 = vrsqrt.pop %v869
          %v871 = vmul.f32 %v860, %v870
          %v872 = vld [vmem:[#allocation4] sm:$0xff]
          %v873 = vld [vmem:[#allocation4 + $0x8] sm:$0xff]
          %v874 = vld [vmem:[#allocation4 + $0x10] sm:$0xff]
          %v875 = vld [vmem:[#allocation4 + $0x18] sm:$0xff]
          %v876 = vld [vmem:[#allocation4 + $0x20] sm:$0xff]
          %v877 = vld [vmem:[#allocation4 + $0x28] sm:$0xff]
          %v878 = vld [vmem:[#allocation4 + $0x30] sm:$0xff]
          %v879 = vld [vmem:[#allocation4 + $0x38] sm:$0xff]
          %v880 = vld [vmem:[#allocation4 + $0x40] sm:$0xff]
          %v881 = vld [vmem:[#allocation4 + $0x48] sm:$0xff]
          %v882 = vld [vmem:[#allocation4 + $0x50] sm:$0xff]
          %v883 = vld [vmem:[#allocation4 + $0x58] sm:$0xff]
          %v884 = vld [vmem:[#allocation4 + $0x60] sm:$0xff]
          %v885 = vld [vmem:[#allocation4 + $0x68] sm:$0xff]
          %v886 = vld [vmem:[#allocation4 + $0x70] sm:$0xff]
          %v887 = vld [vmem:[#allocation4 + $0x78] sm:$0xff]
          %v888 = vld [vmem:[%s6] sm:$0x1]
          %v889 = vrot.slane %v871, 4
          %v890 = vadd.f32 %v871, %v889
          %v891 = vrot.slane %v890, 2
          %v892 = vadd.f32 %v890, %v891
          %v893 = vrot.slane %v892, 1
          %v894 = vadd.f32 %v892, %v893
          %v895 = vmul.f32 %v894, %v740
          %v896 = vsub.f32 %v871, %v895
          %v897 = vmul.f32 %v896, %v896
          %v898 = vrot.slane %v897, 4
          %v899 = vadd.f32 %v897, %v898
          %v900 = vrot.slane %v899, 2
          %v901 = vadd.f32 %v899, %v900
          %v902 = vrot.slane %v901, 1
          %v903 = vadd.f32 %v901, %v902
          %v904 = vmul.f32 %v903, %v740
          %v905 = vadd.f32 %v904, 1e-05
          %v906 = vrsqrt.pop %v905
          %v907 = vmul.f32 %v896, %v906
          %v909 = vlaneseq
          %v910 = vshrl.u32 %v909, 7
          %v911 = vsub.s32 0, %v910
          %v912 = vrot.slane %v888, %v911
          %914 = vmatprep.subr.mxu0 0.0
          %915 = vmatpush1.msra.mxu0 %v887
          %916 = vmatprep.subr.mxu0 0.0
          %917 = vmatpush1.msra.mxu0 %v886
          %918 = vmatprep.subr.mxu0 0.0
          %919 = vmatpush1.msra.mxu0 %v885
          %920 = vmatprep.subr.mxu0 0.0
          %921 = vmatpush1.msra.mxu0 %v884
          %922 = vmatprep.subr.mxu0 0.0
          %923 = vmatpush1.msra.mxu0 %v883
          %924 = vmatprep.subr.mxu0 0.0
          %925 = vmatpush1.msra.mxu0 %v882
          %926 = vmatprep.subr.mxu0 0.0
          %927 = vmatpush1.msra.mxu0 %v881
          %928 = vmatprep.subr.mxu0 0.0
          %929 = vmatpush1.msra.mxu0 %v880
          %930 = vmatprep.subr.mxu0 0.0
          %931 = vmatpush1.msra.mxu0 %v879
          %932 = vmatprep.subr.mxu0 0.0
          %933 = vmatpush1.msra.mxu0 %v878
          %934 = vmatprep.subr.mxu0 0.0
          %935 = vmatpush1.msra.mxu0 %v877
          %936 = vmatprep.subr.mxu0 0.0
          %937 = vmatpush1.msra.mxu0 %v876
          %938 = vmatprep.subr.mxu0 0.0
          %939 = vmatpush1.msra.mxu0 %v875
          %940 = vmatprep.subr.mxu0 0.0
          %941 = vmatpush1.msra.mxu0 %v874
          %942 = vmatprep.subr.mxu0 0.0
          %943 = vmatpush1.msra.mxu0 %v873
          %944 = vmatprep.subr.mxu0 0.0
          %945 = vmatpush1.msra.mxu0 %v872
          %946 = vmatprep.subr.mxu0 0.0
          %947 = vmatpush2.msra.mxu0 0.0
          %948 = vmatprep.subr.mxu0 0.0
          %949 = vmatpush2.msra.mxu0 0.0
          %950 = vmatprep.subr.mxu0 0.0
          %951 = vmatpush2.msra.mxu0 0.0
          %952 = vmatprep.subr.mxu0 0.0
          %953 = vmatpush2.msra.mxu0 0.0
          %954 = vmatprep.subr.mxu0 0.0
          %955 = vmatpush2.msra.mxu0 0.0
          %956 = vmatprep.subr.mxu0 0.0
          %957 = vmatpush2.msra.mxu0 0.0
          %958 = vmatprep.subr.mxu0 0.0
          %959 = vmatpush2.msra.mxu0 0.0
          %960 = vmatprep.subr.mxu0 0.0
          %961 = vmatpush2.msra.mxu0 0.0
          %962 = vmatprep.subr.mxu0 0.0
          %963 = vmatpush2.msra.mxu0 0.0
          %964 = vmatprep.subr.mxu0 0.0
          %965 = vmatpush2.msra.mxu0 0.0
          %966 = vmatprep.subr.mxu0 0.0
          %967 = vmatpush2.msra.mxu0 0.0
          %968 = vmatprep.subr.mxu0 0.0
          %969 = vmatpush2.msra.mxu0 0.0
          %970 = vmatprep.subr.mxu0 0.0
          %971 = vmatpush2.msra.mxu0 0.0
          %972 = vmatprep.subr.mxu0 0.0
          %973 = vmatpush2.msra.mxu0 0.0
          %974 = vmatprep.subr.mxu0 0.0
          %975 = vmatpush2.msra.mxu0 0.0
          %976 = vmatprep.subr.mxu0 0.0
          %977 = vmatpush2.msra.mxu0 0.0
          %978 = vmatprep.mubr.f32.mxu0 0.0
          %979 = vmatmul.mubr.f32.gmra.mxu0 %v907
          %v980 = vpop.f32.mrf.mxu0
          %v981 = vadd.f32 %v912, %v980
          %v982 = vpop.f32.mrf.mxu0
          %983 = vdwg.mxu0
          %984 = vst [vmem:[%s639] sm:$0xff] %v981
        $region124: #{ddcca_forward.1} parent=87 // pred_fallthru
          _
        %p985 = scmp.eq.s32.totalorder %s33, 1
        // Predicated region
        $region125: #{ddcca_forward.1} parent=87 // pred_check
          %p986 = pneg %p985
        $region126: #{ddcca_forward.1} parent=87 // pred_check_branch
          %988 = sbr.rel (%p986) target = $region128
        $region127: #{ddcca_forward.1} parent=87 // pred_region
          %v989 = vld [vmem:[%s7] sm:$0xff]
          %v990 = vld [vmem:[%s7 + $0x8] sm:$0xff]
          %v991 = vld [vmem:[#allocation7] sm:$0xff]
          %vm992 = vcmask 64512
          %v994 = vsel %vm992, %v989, 0
          %v997 = vsel %vm992, %v990, 0
          %999 = vmatprep.subr.mxu0 0.0
          %1000 = vmatpush1.msra.mxu0 0.0
          %1001 = vmatprep.subr.mxu0 0.0
          %1002 = vmatpush1.msra.mxu0 0.0
          %1003 = vmatprep.subr.mxu0 0.0
          %1004 = vmatpush1.msra.mxu0 0.0
          %1005 = vmatprep.subr.mxu0 0.0
          %1006 = vmatpush1.msra.mxu0 0.0
          %1007 = vmatprep.subr.mxu0 0.0
          %1008 = vmatpush1.msra.mxu0 0.0
          %1009 = vmatprep.subr.mxu0 0.0
          %1010 = vmatpush1.msra.mxu0 0.0
          %1011 = vmatprep.subr.mxu0 0.0
          %1012 = vmatpush1.msra.mxu0 0.0
          %1013 = vmatprep.subr.mxu0 0.0
          %1014 = vmatpush1.msra.mxu0 0.0
          %1015 = vmatprep.subr.mxu0 0.0
          %1016 = vmatpush1.msra.mxu0 0.0
          %1017 = vmatprep.subr.mxu0 0.0
          %1018 = vmatpush1.msra.mxu0 0.0
          %1019 = vmatprep.subr.mxu0 0.0
          %1020 = vmatpush1.msra.mxu0 0.0
          %1021 = vmatprep.subr.mxu0 0.0
          %1022 = vmatpush1.msra.mxu0 0.0
          %1023 = vmatprep.subr.mxu0 0.0
          %1024 = vmatpush1.msra.mxu0 0.0
          %1025 = vmatprep.subr.mxu0 0.0
          %1026 = vmatpush1.msra.mxu0 0.0
          %1027 = vmatprep.subr.mxu0 0.0
          %1028 = vmatpush1.msra.mxu0 0.0
          %1029 = vmatprep.subr.mxu0 0.0
          %1030 = vmatpush1.msra.mxu0 %v991
          %1031 = vmatprep.subr.mxu0 0.0
          %1032 = vmatpush2.msra.mxu0 0.0
          %1033 = vmatprep.subr.mxu0 0.0
          %1034 = vmatpush2.msra.mxu0 0.0
          %1035 = vmatprep.subr.mxu0 0.0
          %1036 = vmatpush2.msra.mxu0 0.0
          %1037 = vmatprep.subr.mxu0 0.0
          %1038 = vmatpush2.msra.mxu0 0.0
          %1039 = vmatprep.subr.mxu0 0.0
          %1040 = vmatpush2.msra.mxu0 0.0
          %1041 = vmatprep.subr.mxu0 0.0
          %1042 = vmatpush2.msra.mxu0 0.0
          %1043 = vmatprep.subr.mxu0 0.0
          %1044 = vmatpush2.msra.mxu0 0.0
          %1045 = vmatprep.subr.mxu0 0.0
          %1046 = vmatpush2.msra.mxu0 0.0
          %1047 = vmatprep.subr.mxu0 0.0
          %1048 = vmatpush2.msra.mxu0 0.0
          %1049 = vmatprep.subr.mxu0 0.0
          %1050 = vmatpush2.msra.mxu0 0.0
          %1051 = vmatprep.subr.mxu0 0.0
          %1052 = vmatpush2.msra.mxu0 0.0
          %1053 = vmatprep.subr.mxu0 0.0
          %1054 = vmatpush2.msra.mxu0 0.0
          %1055 = vmatprep.subr.mxu0 0.0
          %1056 = vmatpush2.msra.mxu0 0.0
          %1057 = vmatprep.subr.mxu0 0.0
          %1058 = vmatpush2.msra.mxu0 0.0
          %1059 = vmatprep.subr.mxu0 0.0
          %1060 = vmatpush2.msra.mxu0 0.0
          %1061 = vmatprep.subr.mxu0 0.0
          %1062 = vmatpush2.msra.mxu0 0.0
          %1063 = vmatprep.mubr.f32.mxu0 0.0
          %1064 = vmatmul.mubr.f32.gmra.mxu0 %v994
          %v1065 = vpop.f32.mrf.mxu0
          %v1066 = vadd.f32 0.0, %v1065
          %v1067 = vpop.f32.mrf.mxu0
          %1068 = vmatprep.mubr.f32.mxu0 0.0
          %1069 = vmatmul.mubr.f32.gmra.mxu0 %v997
          %v1070 = vpop.f32.mrf.mxu0
          %v1071 = vadd.f32 0.0, %v1070
          %v1072 = vpop.f32.mrf.mxu0
          %1073 = vdwg.mxu0
          %v1074 = vadd.f32 %v1066, %v1071
          %v1075 = vrot.slane %v1074, 4
          %v1076 = vadd.f32 %v1074, %v1075
          %v1077 = vrot.slane %v1076, 2
          %v1078 = vadd.f32 %v1076, %v1077
          %v1079 = vrot.slane %v1078, 1
          %v1080 = vadd.f32 %v1078, %v1079
          %v1081 = vrcp.pop 16.0
          %v1082 = vmul.f32 %v1080, %v1081
          %v1083 = vsub.f32 %v1066, %v1082
          %v1084 = vsub.f32 %v1071, %v1082
          %v1085 = vmul.f32 %v1083, %v1083
          %v1086 = vmul.f32 %v1084, %v1084
          %v1087 = vadd.f32 %v1085, %v1086
          %v1088 = vrot.slane %v1087, 4
          %v1089 = vadd.f32 %v1087, %v1088
          %v1090 = vrot.slane %v1089, 2
          %v1091 = vadd.f32 %v1089, %v1090
          %v1092 = vrot.slane %v1091, 1
          %v1093 = vadd.f32 %v1091, %v1092
          %v1094 = vmul.f32 %v1093, %v1081
          %v1095 = vadd.f32 %v1094, 1e-05
          %v1096 = vrsqrt.pop %v1095
          %v1097 = vmul.f32 %v1083, %v1096
          %v1098 = vmul.f32 %v1084, %v1096
          %vm1099 = vcmp.ge.f32.partialorder %v1097, 0.0
          %vm1100 = vcmp.ge.f32.partialorder %v1098, 0.0
          %v1101 = vmul.f32 %v1097, 2.236068
          %v1102 = vmul.f32 %v1098, 2.236068
          %v1103 = vsel %vm1099, %v1097, %v1101
          %v1104 = vsel %vm1100, %v1098, %v1102
          %v1105 = vld [vmem:[#allocation9] sm:$0xff]
          %v1106 = vld [vmem:[#allocation9 + $0x8] sm:$0xff]
          %v1107 = vld [vmem:[#allocation9 + $0x10] sm:$0xff]
          %v1108 = vld [vmem:[#allocation9 + $0x18] sm:$0xff]
          %v1109 = vld [vmem:[#allocation9 + $0x20] sm:$0xff]
          %v1110 = vld [vmem:[#allocation9 + $0x28] sm:$0xff]
          %v1111 = vld [vmem:[#allocation9 + $0x30] sm:$0xff]
          %v1112 = vld [vmem:[#allocation9 + $0x38] sm:$0xff]
          %v1113 = vld [vmem:[#allocation9 + $0x40] sm:$0xff]
          %v1114 = vld [vmem:[#allocation9 + $0x48] sm:$0xff]
          %v1115 = vld [vmem:[#allocation9 + $0x50] sm:$0xff]
          %v1116 = vld [vmem:[#allocation9 + $0x58] sm:$0xff]
          %v1117 = vld [vmem:[#allocation9 + $0x60] sm:$0xff]
          %v1118 = vld [vmem:[#allocation9 + $0x68] sm:$0xff]
          %v1119 = vld [vmem:[#allocation9 + $0x70] sm:$0xff]
          %v1120 = vld [vmem:[#allocation9 + $0x78] sm:$0xff]
          %1121 = vmatprep.subr.mxu0 0.0
          %1122 = vmatpush1.msra.mxu0 %v1120
          %1123 = vmatprep.subr.mxu0 0.0
          %1124 = vmatpush1.msra.mxu0 %v1119
          %1125 = vmatprep.subr.mxu0 0.0
          %1126 = vmatpush1.msra.mxu0 %v1118
          %1127 = vmatprep.subr.mxu0 0.0
          %1128 = vmatpush1.msra.mxu0 %v1117
          %1129 = vmatprep.subr.mxu0 0.0
          %1130 = vmatpush1.msra.mxu0 %v1116
          %1131 = vmatprep.subr.mxu0 0.0
          %1132 = vmatpush1.msra.mxu0 %v1115
          %1133 = vmatprep.subr.mxu0 0.0
          %1134 = vmatpush1.msra.mxu0 %v1114
          %1135 = vmatprep.subr.mxu0 0.0
          %1136 = vmatpush1.msra.mxu0 %v1113
          %1137 = vmatprep.subr.mxu0 0.0
          %1138 = vmatpush1.msra.mxu0 %v1112
          %1139 = vmatprep.subr.mxu0 0.0
          %1140 = vmatpush1.msra.mxu0 %v1111
          %1141 = vmatprep.subr.mxu0 0.0
          %1142 = vmatpush1.msra.mxu0 %v1110
          %1143 = vmatprep.subr.mxu0 0.0
          %1144 = vmatpush1.msra.mxu0 %v1109
          %1145 = vmatprep.subr.mxu0 0.0
          %1146 = vmatpush1.msra.mxu0 %v1108
          %1147 = vmatprep.subr.mxu0 0.0
          %1148 = vmatpush1.msra.mxu0 %v1107
          %1149 = vmatprep.subr.mxu0 0.0
          %1150 = vmatpush1.msra.mxu0 %v1106
          %1151 = vmatprep.subr.mxu0 0.0
          %1152 = vmatpush1.msra.mxu0 %v1105
          %1153 = vmatprep.subr.mxu0 0.0
          %1154 = vmatpush2.msra.mxu0 0.0
          %1155 = vmatprep.subr.mxu0 0.0
          %1156 = vmatpush2.msra.mxu0 0.0
          %1157 = vmatprep.subr.mxu0 0.0
          %1158 = vmatpush2.msra.mxu0 0.0
          %1159 = vmatprep.subr.mxu0 0.0
          %1160 = vmatpush2.msra.mxu0 0.0
          %1161 = vmatprep.subr.mxu0 0.0
          %1162 = vmatpush2.msra.mxu0 0.0
          %1163 = vmatprep.subr.mxu0 0.0
          %1164 = vmatpush2.msra.mxu0 0.0
          %1165 = vmatprep.subr.mxu0 0.0
          %1166 = vmatpush2.msra.mxu0 0.0
          %1167 = vmatprep.subr.mxu0 0.0
          %1168 = vmatpush2.msra.mxu0 0.0
          %1169 = vmatprep.subr.mxu0 0.0
          %1170 = vmatpush2.msra.mxu0 0.0
          %1171 = vmatprep.subr.mxu0 0.0
          %1172 = vmatpush2.msra.mxu0 0.0
          %1173 = vmatprep.subr.mxu0 0.0
          %1174 = vmatpush2.msra.mxu0 0.0
          %1175 = vmatprep.subr.mxu0 0.0
          %1176 = vmatpush2.msra.mxu0 0.0
          %1177 = vmatprep.subr.mxu0 0.0
          %1178 = vmatpush2.msra.mxu0 0.0
          %1179 = vmatprep.subr.mxu0 0.0
          %1180 = vmatpush2.msra.mxu0 0.0
          %1181 = vmatprep.subr.mxu0 0.0
          %1182 = vmatpush2.msra.mxu0 0.0
          %1183 = vmatprep.subr.mxu0 0.0
          %1184 = vmatpush2.msra.mxu0 0.0
          %1185 = vmatprep.mubr.f32.mxu0 0.0
          %1186 = vmatmul.mubr.f32.gmra.mxu0 %v1103
          %v1187 = vpop.f32.mrf.mxu0
          %v1188 = vadd.f32 0.0, %v1187
          %v1189 = vpop.f32.mrf.mxu0
          %1190 = vmatprep.mubr.f32.mxu0 0.0
          %1191 = vmatmul.mubr.f32.gmra.mxu0 %v1104
          %v1192 = vpop.f32.mrf.mxu0
          %v1193 = vadd.f32 0.0, %v1192
          %v1194 = vpop.f32.mrf.mxu0
          %1195 = vdwg.mxu0
          %v1196 = vadd.f32 %v1188, %v1193
          %v1197 = vrot.slane %v1196, 4
          %v1198 = vadd.f32 %v1196, %v1197
          %v1199 = vrot.slane %v1198, 2
          %v1200 = vadd.f32 %v1198, %v1199
          %v1201 = vrot.slane %v1200, 1
          %v1202 = vadd.f32 %v1200, %v1201
          %v1203 = vmul.f32 %v1202, %v1081
          %v1204 = vsub.f32 %v1188, %v1203
          %v1205 = vsub.f32 %v1193, %v1203
          %v1206 = vmul.f32 %v1204, %v1204
          %v1207 = vmul.f32 %v1205, %v1205
          %v1208 = vadd.f32 %v1206, %v1207
          %v1209 = vrot.slane %v1208, 4
          %v1210 = vadd.f32 %v1208, %v1209
          %v1211 = vrot.slane %v1210, 2
          %v1212 = vadd.f32 %v1210, %v1211
          %v1213 = vrot.slane %v1212, 1
          %v1214 = vadd.f32 %v1212, %v1213
          %v1215 = vmul.f32 %v1214, %v1081
          %v1216 = vadd.f32 %v1215, 1e-05
          %v1217 = vrsqrt.pop %v1216
          %v1218 = vmul.f32 %v1204, %v1217
          %v1219 = vmul.f32 %v1205, %v1217
          %vm1220 = vcmp.ge.f32.partialorder %v1218, 0.0
          %vm1221 = vcmp.ge.f32.partialorder %v1219, 0.0
          %v1222 = vmul.f32 %v1218, 2.236068
          %v1223 = vmul.f32 %v1219, 2.236068
          %v1224 = vsel %vm1220, %v1218, %v1222
          %v1225 = vsel %vm1221, %v1219, %v1223
          %v1226 = vld [vmem:[#allocation10] sm:$0xff]
          %v1227 = vld [vmem:[#allocation10 + $0x8] sm:$0xff]
          %v1228 = vld [vmem:[#allocation10 + $0x10] sm:$0xff]
          %v1229 = vld [vmem:[#allocation10 + $0x18] sm:$0xff]
          %v1230 = vld [vmem:[#allocation10 + $0x20] sm:$0xff]
          %v1231 = vld [vmem:[#allocation10 + $0x28] sm:$0xff]
          %v1232 = vld [vmem:[#allocation10 + $0x30] sm:$0xff]
          %v1233 = vld [vmem:[#allocation10 + $0x38] sm:$0xff]
          %v1234 = vld [vmem:[#allocation10 + $0x40] sm:$0xff]
          %v1235 = vld [vmem:[#allocation10 + $0x48] sm:$0xff]
          %v1236 = vld [vmem:[#allocation10 + $0x50] sm:$0xff]
          %v1237 = vld [vmem:[#allocation10 + $0x58] sm:$0xff]
          %v1238 = vld [vmem:[#allocation10 + $0x60] sm:$0xff]
          %v1239 = vld [vmem:[#allocation10 + $0x68] sm:$0xff]
          %v1240 = vld [vmem:[#allocation10 + $0x70] sm:$0xff]
          %v1241 = vld [vmem:[#allocation10 + $0x78] sm:$0xff]
          %1242 = vmatprep.subr.mxu0 0.0
          %1243 = vmatpush1.msra.mxu0 %v1241
          %1244 = vmatprep.subr.mxu0 0.0
          %1245 = vmatpush1.msra.mxu0 %v1240
          %1246 = vmatprep.subr.mxu0 0.0
          %1247 = vmatpush1.msra.mxu0 %v1239
          %1248 = vmatprep.subr.mxu0 0.0
          %1249 = vmatpush1.msra.mxu0 %v1238
          %1250 = vmatprep.subr.mxu0 0.0
          %1251 = vmatpush1.msra.mxu0 %v1237
          %1252 = vmatprep.subr.mxu0 0.0
          %1253 = vmatpush1.msra.mxu0 %v1236
          %1254 = vmatprep.subr.mxu0 0.0
          %1255 = vmatpush1.msra.mxu0 %v1235
          %1256 = vmatprep.subr.mxu0 0.0
          %1257 = vmatpush1.msra.mxu0 %v1234
          %1258 = vmatprep.subr.mxu0 0.0
          %1259 = vmatpush1.msra.mxu0 %v1233
          %1260 = vmatprep.subr.mxu0 0.0
          %1261 = vmatpush1.msra.mxu0 %v1232
          %1262 = vmatprep.subr.mxu0 0.0
          %1263 = vmatpush1.msra.mxu0 %v1231
          %1264 = vmatprep.subr.mxu0 0.0
          %1265 = vmatpush1.msra.mxu0 %v1230
          %1266 = vmatprep.subr.mxu0 0.0
          %1267 = vmatpush1.msra.mxu0 %v1229
          %1268 = vmatprep.subr.mxu0 0.0
          %1269 = vmatpush1.msra.mxu0 %v1228
          %1270 = vmatprep.subr.mxu0 0.0
          %1271 = vmatpush1.msra.mxu0 %v1227
          %1272 = vmatprep.subr.mxu0 0.0
          %1273 = vmatpush1.msra.mxu0 %v1226
          %1274 = vmatprep.subr.mxu0 0.0
          %1275 = vmatpush2.msra.mxu0 0.0
          %1276 = vmatprep.subr.mxu0 0.0
          %1277 = vmatpush2.msra.mxu0 0.0
          %1278 = vmatprep.subr.mxu0 0.0
          %1279 = vmatpush2.msra.mxu0 0.0
          %1280 = vmatprep.subr.mxu0 0.0
          %1281 = vmatpush2.msra.mxu0 0.0
          %1282 = vmatprep.subr.mxu0 0.0
          %1283 = vmatpush2.msra.mxu0 0.0
          %1284 = vmatprep.subr.mxu0 0.0
          %1285 = vmatpush2.msra.mxu0 0.0
          %1286 = vmatprep.subr.mxu0 0.0
          %1287 = vmatpush2.msra.mxu0 0.0
          %1288 = vmatprep.subr.mxu0 0.0
          %1289 = vmatpush2.msra.mxu0 0.0
          %1290 = vmatprep.subr.mxu0 0.0
          %1291 = vmatpush2.msra.mxu0 0.0
          %1292 = vmatprep.subr.mxu0 0.0
          %1293 = vmatpush2.msra.mxu0 0.0
          %1294 = vmatprep.subr.mxu0 0.0
          %1295 = vmatpush2.msra.mxu0 0.0
          %1296 = vmatprep.subr.mxu0 0.0
          %1297 = vmatpush2.msra.mxu0 0.0
          %1298 = vmatprep.subr.mxu0 0.0
          %1299 = vmatpush2.msra.mxu0 0.0
          %1300 = vmatprep.subr.mxu0 0.0
          %1301 = vmatpush2.msra.mxu0 0.0
          %1302 = vmatprep.subr.mxu0 0.0
          %1303 = vmatpush2.msra.mxu0 0.0
          %1304 = vmatprep.subr.mxu0 0.0
          %1305 = vmatpush2.msra.mxu0 0.0
          %1306 = vmatprep.mubr.f32.mxu0 0.0
          %1307 = vmatmul.mubr.f32.gmra.mxu0 %v1224
          %v1308 = vpop.f32.mrf.mxu0
          %v1309 = vadd.f32 0.0, %v1308
          %v1310 = vpop.f32.mrf.mxu0
          %1311 = vmatprep.mubr.f32.mxu0 0.0
          %1312 = vmatmul.mubr.f32.gmra.mxu0 %v1225
          %v1313 = vpop.f32.mrf.mxu0
          %v1314 = vadd.f32 0.0, %v1313
          %v1315 = vpop.f32.mrf.mxu0
          %1316 = vdwg.mxu0
          %v1317 = vld [vmem:[#allocation6] sm:$0xff]
          %vm1318 = vcmask 130048
          %v1319 = vsel %vm1318, %v1317, 0.0
          %v1320 = vrot.slane %v1319, 4
          %v1321 = vadd.f32 %v1319, %v1320
          %v1322 = vrot.slane %v1321, 2
          %v1323 = vadd.f32 %v1321, %v1322
          %v1324 = vrot.slane %v1323, 1
          %v1325 = vadd.f32 %v1323, %v1324
          %v1326 = vrcp.pop 8.0
          %v1327 = vmul.f32 %v1325, %v1326
          %v1328 = vsub.f32 %v1317, %v1327
          %v1329 = vmul.f32 %v1328, %v1328
          %v1330 = vsel %vm1318, %v1329, 0.0
          %v1331 = vrot.slane %v1330, 4
          %v1332 = vadd.f32 %v1330, %v1331
          %v1333 = vrot.slane %v1332, 2
          %v1334 = vadd.f32 %v1332, %v1333
          %v1335 = vrot.slane %v1334, 1
          %v1336 = vadd.f32 %v1334, %v1335
          %v1337 = vmul.f32 %v1336, %v1326
          %v1338 = vadd.f32 %v1337, 1e-05
          %v1339 = vrsqrt.pop %v1338
          %v1340 = vmul.f32 %v1328, %v1339
          %v1341 = vld [vmem:[%s12] sm:$0x1]
          %v1343 = vlaneseq
          %v1344 = vshrl.u32 %v1343, 7
          %v1345 = vsub.s32 0, %v1344
          %v1346 = vrot.slane %v1341, %v1345
          %v1349 = vsel %vm1318, %v1340, 0
          %1351 = vmatprep.subr.mxu0 0.0
          %1352 = vmatpush1.msra.mxu0 0.0
          %1353 = vmatprep.subr.mxu0 0.0
          %1354 = vmatpush1.msra.mxu0 0.0
          %1355 = vmatprep.subr.mxu0 0.0
          %1356 = vmatpush1.msra.mxu0 0.0
          %1357 = vmatprep.subr.mxu0 0.0
          %1358 = vmatpush1.msra.mxu0 0.0
          %1359 = vmatprep.subr.mxu0 0.0
          %1360 = vmatpush1.msra.mxu0 0.0
          %1361 = vmatprep.subr.mxu0 0.0
          %1362 = vmatpush1.msra.mxu0 0.0
          %1363 = vmatprep.subr.mxu0 0.0
          %1364 = vmatpush1.msra.mxu0 0.0
          %1365 = vmatprep.subr.mxu0 0.0
          %1366 = vmatpush1.msra.mxu0 0.0
          %1367 = vmatprep.subr.mxu0 0.0
          %1368 = vmatpush1.msra.mxu0 0.0
          %1369 = vmatprep.subr.mxu0 0.0
          %1370 = vmatpush1.msra.mxu0 0.0
          %1371 = vmatprep.subr.mxu0 0.0
          %1372 = vmatpush1.msra.mxu0 0.0
          %1373 = vmatprep.subr.mxu0 0.0
          %1374 = vmatpush1.msra.mxu0 0.0
          %1375 = vmatprep.subr.mxu0 0.0
          %1376 = vmatpush1.msra.mxu0 0.0
          %1377 = vmatprep.subr.mxu0 0.0
          %1378 = vmatpush1.msra.mxu0 0.0
          %1379 = vmatprep.subr.mxu0 0.0
          %1380 = vmatpush1.msra.mxu0 %v1314
          %1381 = vmatprep.subr.mxu0 0.0
          %1382 = vmatpush1.msra.mxu0 %v1309
          %1383 = vmatprep.subr.mxu0 0.0
          %1384 = vmatpush2.msra.mxu0 0.0
          %1385 = vmatprep.subr.mxu0 0.0
          %1386 = vmatpush2.msra.mxu0 0.0
          %1387 = vmatprep.subr.mxu0 0.0
          %1388 = vmatpush2.msra.mxu0 0.0
          %1389 = vmatprep.subr.mxu0 0.0
          %1390 = vmatpush2.msra.mxu0 0.0
          %1391 = vmatprep.subr.mxu0 0.0
          %1392 = vmatpush2.msra.mxu0 0.0
          %1393 = vmatprep.subr.mxu0 0.0
          %1394 = vmatpush2.msra.mxu0 0.0
          %1395 = vmatprep.subr.mxu0 0.0
          %1396 = vmatpush2.msra.mxu0 0.0
          %1397 = vmatprep.subr.mxu0 0.0
          %1398 = vmatpush2.msra.mxu0 0.0
          %1399 = vmatprep.subr.mxu0 0.0
          %1400 = vmatpush2.msra.mxu0 0.0
          %1401 = vmatprep.subr.mxu0 0.0
          %1402 = vmatpush2.msra.mxu0 0.0
          %1403 = vmatprep.subr.mxu0 0.0
          %1404 = vmatpush2.msra.mxu0 0.0
          %1405 = vmatprep.subr.mxu0 0.0
          %1406 = vmatpush2.msra.mxu0 0.0
          %1407 = vmatprep.subr.mxu0 0.0
          %1408 = vmatpush2.msra.mxu0 0.0
          %1409 = vmatprep.subr.mxu0 0.0
          %1410 = vmatpush2.msra.mxu0 0.0
          %1411 = vmatprep.subr.mxu0 0.0
          %1412 = vmatpush2.msra.mxu0 0.0
          %1413 = vmatprep.subr.mxu0 0.0
          %1414 = vmatpush2.msra.mxu0 0.0
          %1415 = vmatprep.mubr.f32.mxu0 0.0
          %1416 = vmatmul.mubr.f32.gmra.mxu0 %v1349
          %v1417 = vpop.f32.mrf.mxu0
          %v1418 = vadd.f32 %v1346, %v1417
          %v1419 = vpop.f32.mrf.mxu0
          %1420 = vdwg.mxu0
          %v1421 = vrot.slane %v1418, 4
          %v1422 = vadd.f32 %v1418, %v1421
          %v1423 = vrot.slane %v1422, 2
          %v1424 = vadd.f32 %v1422, %v1423
          %v1425 = vrot.slane %v1424, 1
          %v1426 = vadd.f32 %v1424, %v1425
          %v1427 = vmul.f32 %v1426, %v1326
          %v1428 = vsub.f32 %v1418, %v1427
          %v1429 = vmul.f32 %v1428, %v1428
          %v1430 = vrot.slane %v1429, 4
          %v1431 = vadd.f32 %v1429, %v1430
          %v1432 = vrot.slane %v1431, 2
          %v1433 = vadd.f32 %v1431, %v1432
          %v1434 = vrot.slane %v1433, 1
          %v1435 = vadd.f32 %v1433, %v1434
          %v1436 = vmul.f32 %v1435, %v1326
          %v1437 = vadd.f32 %v1436, 1e-05
          %v1438 = vrsqrt.pop %v1437
          %v1439 = vmul.f32 %v1428, %v1438
          %vm1440 = vcmp.ge.f32.partialorder %v1439, 0.0
          %v1441 = vmul.f32 %v1439, 2.236068
          %v1442 = vsel %vm1440, %v1439, %v1441
          %v1443 = vld [vmem:[#allocation12] sm:$0xff]
          %v1444 = vld [vmem:[#allocation12 + $0x8] sm:$0xff]
          %v1445 = vld [vmem:[#allocation12 + $0x10] sm:$0xff]
          %v1446 = vld [vmem:[#allocation12 + $0x18] sm:$0xff]
          %v1447 = vld [vmem:[#allocation12 + $0x20] sm:$0xff]
          %v1448 = vld [vmem:[#allocation12 + $0x28] sm:$0xff]
          %v1449 = vld [vmem:[#allocation12 + $0x30] sm:$0xff]
          %v1450 = vld [vmem:[#allocation12 + $0x38] sm:$0xff]
          %v1451 = vld [vmem:[#allocation12 + $0x40] sm:$0xff]
          %v1452 = vld [vmem:[#allocation12 + $0x48] sm:$0xff]
          %v1453 = vld [vmem:[#allocation12 + $0x50] sm:$0xff]
          %v1454 = vld [vmem:[#allocation12 + $0x58] sm:$0xff]
          %v1455 = vld [vmem:[#allocation12 + $0x60] sm:$0xff]
          %v1456 = vld [vmem:[#allocation12 + $0x68] sm:$0xff]
          %v1457 = vld [vmem:[#allocation12 + $0x70] sm:$0xff]
          %v1458 = vld [vmem:[#allocation12 + $0x78] sm:$0xff]
          %v1459 = vld [vmem:[%s14] sm:$0x1]
          %v1461 = vlaneseq
          %v1462 = vshrl.u32 %v1461, 7
          %v1463 = vsub.s32 0, %v1462
          %v1464 = vrot.slane %v1459, %v1463
          %1466 = vmatprep.subr.mxu0 0.0
          %1467 = vmatpush1.msra.mxu0 %v1458
          %1468 = vmatprep.subr.mxu0 0.0
          %1469 = vmatpush1.msra.mxu0 %v1457
          %1470 = vmatprep.subr.mxu0 0.0
          %1471 = vmatpush1.msra.mxu0 %v1456
          %1472 = vmatprep.subr.mxu0 0.0
          %1473 = vmatpush1.msra.mxu0 %v1455
          %1474 = vmatprep.subr.mxu0 0.0
          %1475 = vmatpush1.msra.mxu0 %v1454
          %1476 = vmatprep.subr.mxu0 0.0
          %1477 = vmatpush1.msra.mxu0 %v1453
          %1478 = vmatprep.subr.mxu0 0.0
          %1479 = vmatpush1.msra.mxu0 %v1452
          %1480 = vmatprep.subr.mxu0 0.0
          %1481 = vmatpush1.msra.mxu0 %v1451
          %1482 = vmatprep.subr.mxu0 0.0
          %1483 = vmatpush1.msra.mxu0 %v1450
          %1484 = vmatprep.subr.mxu0 0.0
          %1485 = vmatpush1.msra.mxu0 %v1449
          %1486 = vmatprep.subr.mxu0 0.0
          %1487 = vmatpush1.msra.mxu0 %v1448
          %1488 = vmatprep.subr.mxu0 0.0
          %1489 = vmatpush1.msra.mxu0 %v1447
          %1490 = vmatprep.subr.mxu0 0.0
          %1491 = vmatpush1.msra.mxu0 %v1446
          %1492 = vmatprep.subr.mxu0 0.0
          %1493 = vmatpush1.msra.mxu0 %v1445
          %1494 = vmatprep.subr.mxu0 0.0
          %1495 = vmatpush1.msra.mxu0 %v1444
          %1496 = vmatprep.subr.mxu0 0.0
          %1497 = vmatpush1.msra.mxu0 %v1443
          %1498 = vmatprep.subr.mxu0 0.0
          %1499 = vmatpush2.msra.mxu0 0.0
          %1500 = vmatprep.subr.mxu0 0.0
          %1501 = vmatpush2.msra.mxu0 0.0
          %1502 = vmatprep.subr.mxu0 0.0
          %1503 = vmatpush2.msra.mxu0 0.0
          %1504 = vmatprep.subr.mxu0 0.0
          %1505 = vmatpush2.msra.mxu0 0.0
          %1506 = vmatprep.subr.mxu0 0.0
          %1507 = vmatpush2.msra.mxu0 0.0
          %1508 = vmatprep.subr.mxu0 0.0
          %1509 = vmatpush2.msra.mxu0 0.0
          %1510 = vmatprep.subr.mxu0 0.0
          %1511 = vmatpush2.msra.mxu0 0.0
          %1512 = vmatprep.subr.mxu0 0.0
          %1513 = vmatpush2.msra.mxu0 0.0
          %1514 = vmatprep.subr.mxu0 0.0
          %1515 = vmatpush2.msra.mxu0 0.0
          %1516 = vmatprep.subr.mxu0 0.0
          %1517 = vmatpush2.msra.mxu0 0.0
          %1518 = vmatprep.subr.mxu0 0.0
          %1519 = vmatpush2.msra.mxu0 0.0
          %1520 = vmatprep.subr.mxu0 0.0
          %1521 = vmatpush2.msra.mxu0 0.0
          %1522 = vmatprep.subr.mxu0 0.0
          %1523 = vmatpush2.msra.mxu0 0.0
          %1524 = vmatprep.subr.mxu0 0.0
          %1525 = vmatpush2.msra.mxu0 0.0
          %1526 = vmatprep.subr.mxu0 0.0
          %1527 = vmatpush2.msra.mxu0 0.0
          %1528 = vmatprep.subr.mxu0 0.0
          %1529 = vmatpush2.msra.mxu0 0.0
          %1530 = vmatprep.mubr.f32.mxu0 0.0
          %1531 = vmatmul.mubr.f32.gmra.mxu0 %v1442
          %v1532 = vpop.f32.mrf.mxu0
          %v1533 = vadd.f32 %v1464, %v1532
          %v1534 = vpop.f32.mrf.mxu0
          %1535 = vdwg.mxu0
          %v1536 = vrot.slane %v1533, 4
          %v1537 = vadd.f32 %v1533, %v1536
          %v1538 = vrot.slane %v1537, 2
          %v1539 = vadd.f32 %v1537, %v1538
          %v1540 = vrot.slane %v1539, 1
          %v1541 = vadd.f32 %v1539, %v1540
          %v1542 = vmul.f32 %v1541, %v1326
          %v1543 = vsub.f32 %v1533, %v1542
          %v1544 = vmul.f32 %v1543, %v1543
          %v1545 = vrot.slane %v1544, 4
          %v1546 = vadd.f32 %v1544, %v1545
          %v1547 = vrot.slane %v1546, 2
          %v1548 = vadd.f32 %v1546, %v1547
          %v1549 = vrot.slane %v1548, 1
          %v1550 = vadd.f32 %v1548, %v1549
          %v1551 = vmul.f32 %v1550, %v1326
          %v1552 = vadd.f32 %v1551, 1e-05
          %v1553 = vrsqrt.pop %v1552
          %v1554 = vmul.f32 %v1543, %v1553
          %vm1555 = vcmp.ge.f32.partialorder %v1554, 0.0
          %v1556 = vmul.f32 %v1554, 2.236068
          %v1557 = vsel %vm1555, %v1554, %v1556
          %v1558 = vld [vmem:[#allocation13] sm:$0xff]
          %v1559 = vld [vmem:[#allocation13 + $0x8] sm:$0xff]
          %v1560 = vld [vmem:[#allocation13 + $0x10] sm:$0xff]
          %v1561 = vld [vmem:[#allocation13 + $0x18] sm:$0xff]
          %v1562 = vld [vmem:[#allocation13 + $0x20] sm:$0xff]
          %v1563 = vld [vmem:[#allocation13 + $0x28] sm:$0xff]
          %v1564 = vld [vmem:[#allocation13 + $0x30] sm:$0xff]
          %v1565 = vld [vmem:[#allocation13 + $0x38] sm:$0xff]
          %v1566 = vld [vmem:[#allocation13 + $0x40] sm:$0xff]
          %v1567 = vld [vmem:[#allocation13 + $0x48] sm:$0xff]
          %v1568 = vld [vmem:[#allocation13 + $0x50] sm:$0xff]
          %v1569 = vld [vmem:[#allocation13 + $0x58] sm:$0xff]
          %v1570 = vld [vmem:[#allocation13 + $0x60] sm:$0xff]
          %v1571 = vld [vmem:[#allocation13 + $0x68] sm:$0xff]
          %v1572 = vld [vmem:[#allocation13 + $0x70] sm:$0xff]
          %v1573 = vld [vmem:[#allocation13 + $0x78] sm:$0xff]
          %v1574 = vld [vmem:[%s16] sm:$0x1]
          %v1576 = vlaneseq
          %v1577 = vshrl.u32 %v1576, 7
          %v1578 = vsub.s32 0, %v1577
          %v1579 = vrot.slane %v1574, %v1578
          %1581 = vmatprep.subr.mxu0 0.0
          %1582 = vmatpush1.msra.mxu0 %v1573
          %1583 = vmatprep.subr.mxu0 0.0
          %1584 = vmatpush1.msra.mxu0 %v1572
          %1585 = vmatprep.subr.mxu0 0.0
          %1586 = vmatpush1.msra.mxu0 %v1571
          %1587 = vmatprep.subr.mxu0 0.0
          %1588 = vmatpush1.msra.mxu0 %v1570
          %1589 = vmatprep.subr.mxu0 0.0
          %1590 = vmatpush1.msra.mxu0 %v1569
          %1591 = vmatprep.subr.mxu0 0.0
          %1592 = vmatpush1.msra.mxu0 %v1568
          %1593 = vmatprep.subr.mxu0 0.0
          %1594 = vmatpush1.msra.mxu0 %v1567
          %1595 = vmatprep.subr.mxu0 0.0
          %1596 = vmatpush1.msra.mxu0 %v1566
          %1597 = vmatprep.subr.mxu0 0.0
          %1598 = vmatpush1.msra.mxu0 %v1565
          %1599 = vmatprep.subr.mxu0 0.0
          %1600 = vmatpush1.msra.mxu0 %v1564
          %1601 = vmatprep.subr.mxu0 0.0
          %1602 = vmatpush1.msra.mxu0 %v1563
          %1603 = vmatprep.subr.mxu0 0.0
          %1604 = vmatpush1.msra.mxu0 %v1562
          %1605 = vmatprep.subr.mxu0 0.0
          %1606 = vmatpush1.msra.mxu0 %v1561
          %1607 = vmatprep.subr.mxu0 0.0
          %1608 = vmatpush1.msra.mxu0 %v1560
          %1609 = vmatprep.subr.mxu0 0.0
          %1610 = vmatpush1.msra.mxu0 %v1559
          %1611 = vmatprep.subr.mxu0 0.0
          %1612 = vmatpush1.msra.mxu0 %v1558
          %1613 = vmatprep.subr.mxu0 0.0
          %1614 = vmatpush2.msra.mxu0 0.0
          %1615 = vmatprep.subr.mxu0 0.0
          %1616 = vmatpush2.msra.mxu0 0.0
          %1617 = vmatprep.subr.mxu0 0.0
          %1618 = vmatpush2.msra.mxu0 0.0
          %1619 = vmatprep.subr.mxu0 0.0
          %1620 = vmatpush2.msra.mxu0 0.0
          %1621 = vmatprep.subr.mxu0 0.0
          %1622 = vmatpush2.msra.mxu0 0.0
          %1623 = vmatprep.subr.mxu0 0.0
          %1624 = vmatpush2.msra.mxu0 0.0
          %1625 = vmatprep.subr.mxu0 0.0
          %1626 = vmatpush2.msra.mxu0 0.0
          %1627 = vmatprep.subr.mxu0 0.0
          %1628 = vmatpush2.msra.mxu0 0.0
          %1629 = vmatprep.subr.mxu0 0.0
          %1630 = vmatpush2.msra.mxu0 0.0
          %1631 = vmatprep.subr.mxu0 0.0
          %1632 = vmatpush2.msra.mxu0 0.0
          %1633 = vmatprep.subr.mxu0 0.0
          %1634 = vmatpush2.msra.mxu0 0.0
          %1635 = vmatprep.subr.mxu0 0.0
          %1636 = vmatpush2.msra.mxu0 0.0
          %1637 = vmatprep.subr.mxu0 0.0
          %1638 = vmatpush2.msra.mxu0 0.0
          %1639 = vmatprep.subr.mxu0 0.0
          %1640 = vmatpush2.msra.mxu0 0.0
          %1641 = vmatprep.subr.mxu0 0.0
          %1642 = vmatpush2.msra.mxu0 0.0
          %1643 = vmatprep.subr.mxu0 0.0
          %1644 = vmatpush2.msra.mxu0 0.0
          %1645 = vmatprep.mubr.f32.mxu0 0.0
          %1646 = vmatmul.mubr.f32.gmra.mxu0 %v1557
          %v1647 = vpop.f32.mrf.mxu0
          %v1648 = vadd.f32 %v1579, %v1647
          %v1649 = vpop.f32.mrf.mxu0
          %1650 = vdwg.mxu0
          %1651 = vst [vmem:[%s639] sm:$0xff] %v1648
        $region128: #{ddcca_forward.1} parent=87 // pred_fallthru
          _
        %p1652 = scmp.lt.s32.totalorder %s33, 1
        %s1653 = scalar_select %p1652, %s33, 1
        %s1654 = smul.addr %s1653, 8
        %s1655 = scalar_lea.vmem %s17, %s1654
        // Predicated region
        $region129: #{ddcca_forward.1} parent=87 // pred_check
          %p1656 = pneg %p408
        $region130: #{ddcca_forward.1} parent=87 // pred_check_branch
          %1658 = sbr.rel (%p1656) target = $region132
        $region131: #{ddcca_forward.1} parent=87 // pred_region
          _
        $region132: #{ddcca_forward.1} parent=87 // pred_fallthru
          _
      $region88: #{ddcca_forward.1} parent=5 // pred_fallthru
        _
      %p1659 = scmp.le.s32.totalorder 2, %s28
      // Predicated region
      $region133: #{ddcca_forward.1} parent=5 // pred_check
        %p1660 = pneg %p1659
      $region134: #{ddcca_forward.1} parent=5 // pred_check_branch
        %1662 = sbr.rel (%p1660) target = $region136
      $region135: #{ddcca_forward.1} parent=5 // pred_region
        %s1663 = ssub.s32 %s28, 2
        // Predicated region
        $region137: #{ddcca_forward.1} parent=135 // pred_check
          %p1664 = pneg %p414
        $region138: #{ddcca_forward.1} parent=135 // pred_check_branch
          %1666 = sbr.rel (%p1664) target = $region140
        $region139: #{ddcca_forward.1} parent=135 // pred_region
          %p1667 = scmp.lt.s32.totalorder %s34, 1
          %s1668 = scalar_select %p1667, %s34, 1
          %s1669 = smul.addr %s1668, 8
          %s1670 = scalar_lea.vmem %s17, %s1669
        $region140: #{ddcca_forward.1} parent=135 // pred_fallthru
          _
      $region136: #{ddcca_forward.1} parent=5 // pred_fallthru
        _
    $region6: #{ddcca_forward.1} parent=1 // loop_footer
      %s32 = sadd.s32 1, %s28
    $region7: #{ddcca_forward.1} parent=1 // loop_footer_branch
      %27 = sbr.rel target = $region3
    $region8: #{ddcca_forward.1} parent=1 // loop_exit
      _
    %1671 = vsyncpa [#allocation3], 1
    %s1672 = scalar_lea.sflag [#allocation3], 1
    %1673 = vsyncpa %s1672, 1
    %1674 = vsyncpa [#allocation5], 1
    %1675 = vsyncpa [#allocation8], 1
    %1676 = vsyncpa [#allocation11], 1
    %1677 = vsyncpa [#allocation14], 1

</llo_original>
